<compile_context>
chip_gen: v5e
topology: v5e:2x2
jax: 0.10.0
libtpu: 0.0.40
codegen_flags: <defaults>
</compile_context>

<pallas_src>
import jax
import jax.numpy as jnp
from jax.experimental import pallas as pl
from jax.experimental.pallas import tpu as pltpu

N_CLASSES = 94
STAT_DIM = 162            # unused by forward(), kept for shape fidelity
H1, H2, H3 = 256, 1024, 512
N_CLASSES_PAD = 128       # pad class dim to a full lane width for the kernel


# ---------------------------------------------------------------------------
# Kernel
# ---------------------------------------------------------------------------
def _readout_kernel(x_ref, w1_ref, b1_ref, w2_ref, b2_ref, w3_ref, b3_ref, o_ref):
    # x tile: [TB, 256] f32 -> bf16 for the MXU.
    x = x_ref[...].astype(jnp.bfloat16)

    # Linear(256, 1024) + ReLU   (bf16 x bf16 MXU, f32 accumulate, bf16 ReLU)
    h = jnp.dot(x, w1_ref[...], preferred_element_type=jnp.float32) + b1_ref[...]
    h = jnp.maximum(h.astype(jnp.bfloat16), 0.0)

    # Linear(1024, 512) + ReLU
    h = jnp.dot(h, w2_ref[...], preferred_element_type=jnp.float32) + b2_ref[...]
    h = jnp.maximum(h.astype(jnp.bfloat16), 0.0)

    # Dropout(0.5) -> identity (eval mode)

    # Linear(512, 128-padded classes)
    out = jnp.dot(h, w3_ref[...], preferred_element_type=jnp.float32) + b3_ref[...]
    o_ref[...] = out.astype(o_ref.dtype)


# ---------------------------------------------------------------------------
# One-time parameter preparation (hoisted off the hot path)
# ---------------------------------------------------------------------------
def prepare_params(params):
    """Cast weights to bf16, pad the final projection to 128 lanes, reshape
    biases to (1, F). Call once; reuse the result for every forward call."""
    w1, b1, w2, b2, w3, b3 = params
    w3p = jnp.zeros((H3, N_CLASSES_PAD), jnp.float32).at[:, :N_CLASSES].set(w3)
    b3p = jnp.zeros((1, N_CLASSES_PAD), jnp.float32).at[:, :N_CLASSES].set(b3)
    return (
        w1.astype(jnp.bfloat16),
        b1.reshape(1, H2).astype(jnp.float32),
        w2.astype(jnp.bfloat16),
        b2.reshape(1, H3).astype(jnp.float32),
        w3p.astype(jnp.bfloat16),
        b3p,
    )


def _choose_batch_tile(B):
    """Batch tile: single (sublane-rounded) tile for small B; otherwise split
    into >= 2 tiles (v7x megacore) with per-tile rows capped at 1024."""
    if B <= 256:
        return max(8, ((B + 7) // 8) * 8)
    half = (B + 1) // 2
    tb = ((half + 127) // 128) * 128
    return min(1024, tb)


# ---------------------------------------------------------------------------
# Forward
# ---------------------------------------------------------------------------
@jax.jit
def mlp_readout_forward(spec_feat, prepared_params):
    """spec_feat: [B, 256] f32. prepared_params: output of prepare_params().
    Returns logits [B, n_classes] f32."""
    w1, b1, w2, b2, w3p, b3p = prepared_params
    B = spec_feat.shape[0]

    TB = _choose_batch_tile(B)
    n_tiles = pl.cdiv(B, TB)   # ragged last tile: OOB reads are garbage rows,
                               # OOB writes masked; rows are independent.

    # Batch-tiled activations; weights/biases resident (same (0,0) block).
    x_spec = pl.BlockSpec((TB, H1), lambda i: (i, 0))
    w1_spec = pl.BlockSpec((H1, H2), lambda i: (0, 0))
    b1_spec = pl.BlockSpec((1, H2), lambda i: (0, 0))
    w2_spec = pl.BlockSpec((H2, H3), lambda i: (0, 0))
    b2_spec = pl.BlockSpec((1, H3), lambda i: (0, 0))
    w3_spec = pl.BlockSpec((H3, N_CLASSES_PAD), lambda i: (0, 0))
    b3_spec = pl.BlockSpec((1, N_CLASSES_PAD), lambda i: (0, 0))
    o_spec = pl.BlockSpec((TB, N_CLASSES_PAD), lambda i: (i, 0))

    weight_bytes = 2 * (H1 * H2 + H2 * H3 + H3 * N_CLASSES_PAD)   # bf16
    cost = pl.CostEstimate(
        flops=2 * B * (H1 * H2 + H2 * H3 + H3 * N_CLASSES_PAD),
        transcendentals=0,
        bytes_accessed=weight_bytes + 4 * B * (H1 + N_CLASSES_PAD),
    )

    out_pad = pl.pallas_call(
        _readout_kernel,
        out_shape=jax.ShapeDtypeStruct((B, N_CLASSES_PAD), jnp.float32),
        grid=(n_tiles,),
        in_specs=[x_spec, w1_spec, b1_spec, w2_spec, b2_spec, w3_spec, b3_spec],
        out_specs=o_spec,
        compiler_params=pltpu.CompilerParams(
            dimension_semantics=("parallel",),
            vmem_limit_bytes=32 << 20,
        ),
        cost_estimate=cost,
    )(spec_feat, w1, b1, w2, b2, w3p, b3p)

    # Keep the original module's output contract: [B, n_classes].
    # (If the consumer tolerates 128-wide padded logits, return out_pad instead.)
    return out_pad[:, :N_CLASSES]


# ---------------------------------------------------------------------------
# Init / reference
# ---------------------------------------------------------------------------
def init_params(key):
    """Deterministic parameter init matching nn.Linear shapes (stored transposed)."""
    ks = jax.random.split(key, 6)

    def linear(kw, kb, fan_in, fan_out):
        bound = 1.0 / jnp.sqrt(fan_in)
        w = jax.random.uniform(kw, (fan_in, fan_out), jnp.float32, -bound, bound)
        b = jax.random.uniform(kb, (fan_out,), jnp.float32, -bound, bound)
        return w, b

    w1, b1 = linear(ks[0], ks[1], H1, H2)          # Linear(256, 1024)
    w2, b2 = linear(ks[2], ks[3], H2, H3)          # Linear(1024, 512)
    w3, b3 = linear(ks[4], ks[5], H3, N_CLASSES)   # Linear(512, 94)
    return (w1, b1, w2, b2, w3, b3)


def reference_forward_f32(spec_feat, params):
    w1, b1, w2, b2, w3, b3 = params
    h = jnp.maximum(spec_feat @ w1 + b1, 0.0)
    h = jnp.maximum(h @ w2 + b2, 0.0)
    return h @ w3 + b3


def reference_forward_bf16(spec_feat, prepared_params):
    """Same bf16-weight / bf16-ReLU math as the kernel, in plain jnp."""
    w1, b1, w2, b2, w3p, b3p = prepared_params
    x = spec_feat.astype(jnp.bfloat16)
    h = jnp.dot(x, w1, preferred_element_type=jnp.float32) + b1
    h = jnp.maximum(h.astype(jnp.bfloat16), 0.0)
    h = jnp.dot(h, w2, preferred_element_type=jnp.float32) + b2
    h = jnp.maximum(h.astype(jnp.bfloat16), 0.0)
    out = jnp.dot(h, w3p, preferred_element_type=jnp.float32) + b3p
    return out[:, :N_CLASSES]


if __name__ == "__main__":
    key = jax.random.PRNGKey(0)
    k_param, k_spec, k_stat, k_spec2 = jax.random.split(key, 4)

    params = init_params(k_param)
    prepared = prepare_params(params)          # one-time prep, off the hot path

    # --- Small serving-style batch (single tile) -------------------------
    B = 8
    spec_feat = jax.random.normal(k_spec, (B, H1), jnp.float32)
    stat_feat = jax.random.normal(k_stat, (B, STAT_DIM), jnp.float32)  # unused by forward

    # x = (spec_feat, stat_feat) — forward only uses spec_feat
    out = jax.block_until_ready(mlp_readout_forward(spec_feat, prepared))
    assert out.shape == (B, N_CLASSES), out.shape

    ref_bf16 = reference_forward_bf16(spec_feat, prepared)
    assert jnp.allclose(out, ref_bf16, atol=2e-3, rtol=2e-3), "mismatch vs bf16 reference"
    ref_f32 = reference_forward_f32(spec_feat, params)
    assert jnp.allclose(out, ref_f32, atol=5e-2, rtol=5e-2), "mismatch vs f32 reference"

    # --- Multi-tile batch with ragged last block (megacore split path) ---
    B2 = 300
    spec_feat2 = jax.random.normal(k_spec2, (B2, H1), jnp.float32)
    out2 = jax.block_until_ready(mlp_readout_forward(spec_feat2, prepared))
    assert out2.shape == (B2, N_CLASSES), out2.shape
    ref2 = reference_forward_bf16(spec_feat2, prepared)
    assert jnp.allclose(out2, ref2, atol=2e-3, rtol=2e-3), "mismatch on ragged batch"

    print("KERNEL_OK")
</pallas_src>

<mosaic_0001>
module attributes {stable_mosaic.version = 11 : i64} {
  func.func @_readout_kernel(%arg0: i32, %arg1: memref<8x256xf32, #tpu.memory_space<vmem>>, %arg2: memref<256x1024xbf16, #tpu.memory_space<vmem>>, %arg3: memref<1x1024xf32, #tpu.memory_space<vmem>>, %arg4: memref<1024x512xbf16, #tpu.memory_space<vmem>>, %arg5: memref<1x512xf32, #tpu.memory_space<vmem>>, %arg6: memref<512x128xbf16, #tpu.memory_space<vmem>>, %arg7: memref<1x128xf32, #tpu.memory_space<vmem>>, %arg8: memref<8x128xf32, #tpu.memory_space<vmem>>) attributes {dimension_semantics = [#tpu.dimension_semantics<parallel>], iteration_bounds = array<i64: 1>, scalar_prefetch = 0 : i64, scratch_operands = 0 : i64, tpu.core_type = #tpu.core_type<tc>, window_params = [{transform_indices = @transform_0, window_bounds = array<i64: 8, 256>}, {pipeline_mode = #tpu.pipeline_mode<synchronous>, transform_indices = @transform_1, window_bounds = array<i64: 256, 1024>}, {pipeline_mode = #tpu.pipeline_mode<synchronous>, transform_indices = @transform_2, window_bounds = array<i64: 1, 1024>}, {pipeline_mode = #tpu.pipeline_mode<synchronous>, transform_indices = @transform_3, window_bounds = array<i64: 1024, 512>}, {pipeline_mode = #tpu.pipeline_mode<synchronous>, transform_indices = @transform_4, window_bounds = array<i64: 1, 512>}, {pipeline_mode = #tpu.pipeline_mode<synchronous>, transform_indices = @transform_5, window_bounds = array<i64: 512, 128>}, {pipeline_mode = #tpu.pipeline_mode<synchronous>, transform_indices = @transform_6, window_bounds = array<i64: 1, 128>}, {transform_indices = @transform_7, window_bounds = array<i64: 8, 128>}]} {
    %c0 = arith.constant 0 : index
    %c0_0 = arith.constant 0 : index
    %0 = vector.load %arg1[%c0, %c0_0] : memref<8x256xf32, #tpu.memory_space<vmem>>, vector<8x256xf32>
    %1 = arith.truncf %0 : vector<8x256xf32> to vector<8x256xbf16>
    %c0_1 = arith.constant 0 : index
    %c0_2 = arith.constant 0 : index
    %2 = vector.load %arg2[%c0_1, %c0_2] : memref<256x1024xbf16, #tpu.memory_space<vmem>>, vector<256x1024xbf16>
    %cst = arith.constant dense<0.000000e+00> : vector<8x1024xf32>
    %3 = tpu.matmul %1, %2, %cst {dimension_numbers = #tpu.dot_dimension_numbers<[1], [0], [0], [1], [0, 0, 1, 1], [], []>} : vector<8x256xbf16>, vector<256x1024xbf16>, vector<8x1024xf32> -> vector<8x1024xf32>
    %c0_3 = arith.constant 0 : index
    %c0_4 = arith.constant 0 : index
    %4 = vector.load %arg3[%c0_3, %c0_4] : memref<1x1024xf32, #tpu.memory_space<vmem>>, vector<1x1024xf32>
    %5 = vector.broadcast %4 : vector<1x1024xf32> to vector<8x1024xf32>
    %6 = arith.addf %3, %5 : vector<8x1024xf32>
    %7 = arith.truncf %6 : vector<8x1024xf32> to vector<8x1024xbf16>
    %cst_5 = arith.constant 0.000000e+00 : bf16
    %8 = vector.broadcast %cst_5 : bf16 to vector<8x1024xbf16>
    %9 = arith.maximumf %7, %8 : vector<8x1024xbf16>
    %c0_6 = arith.constant 0 : index
    %c0_7 = arith.constant 0 : index
    %10 = vector.load %arg4[%c0_6, %c0_7] : memref<1024x512xbf16, #tpu.memory_space<vmem>>, vector<1024x512xbf16>
    %cst_8 = arith.constant dense<0.000000e+00> : vector<8x512xf32>
    %11 = tpu.matmul %9, %10, %cst_8 {dimension_numbers = #tpu.dot_dimension_numbers<[1], [0], [0], [1], [0, 0, 1, 1], [], []>} : vector<8x1024xbf16>, vector<1024x512xbf16>, vector<8x512xf32> -> vector<8x512xf32>
    %c0_9 = arith.constant 0 : index
    %c0_10 = arith.constant 0 : index
    %12 = vector.load %arg5[%c0_9, %c0_10] : memref<1x512xf32, #tpu.memory_space<vmem>>, vector<1x512xf32>
    %13 = vector.broadcast %12 : vector<1x512xf32> to vector<8x512xf32>
    %14 = arith.addf %11, %13 : vector<8x512xf32>
    %15 = arith.truncf %14 : vector<8x512xf32> to vector<8x512xbf16>
    %cst_11 = arith.constant 0.000000e+00 : bf16
    %16 = vector.broadcast %cst_11 : bf16 to vector<8x512xbf16>
    %17 = arith.maximumf %15, %16 : vector<8x512xbf16>
    %c0_12 = arith.constant 0 : index
    %c0_13 = arith.constant 0 : index
    %18 = vector.load %arg6[%c0_12, %c0_13] : memref<512x128xbf16, #tpu.memory_space<vmem>>, vector<512x128xbf16>
    %cst_14 = arith.constant dense<0.000000e+00> : vector<8x128xf32>
    %19 = tpu.matmul %17, %18, %cst_14 {dimension_numbers = #tpu.dot_dimension_numbers<[1], [0], [0], [1], [0, 0, 1, 1], [], []>} : vector<8x512xbf16>, vector<512x128xbf16>, vector<8x128xf32> -> vector<8x128xf32>
    %c0_15 = arith.constant 0 : index
    %c0_16 = arith.constant 0 : index
    %20 = vector.load %arg7[%c0_15, %c0_16] : memref<1x128xf32, #tpu.memory_space<vmem>>, vector<1x128xf32>
    %21 = vector.broadcast %20 : vector<1x128xf32> to vector<8x128xf32>
    %22 = arith.addf %19, %21 : vector<8x128xf32>
    %c0_17 = arith.constant 0 : index
    %c0_18 = arith.constant 0 : index
    %23 = vector.load %arg8[%c0_17, %c0_18] : memref<8x128xf32, #tpu.memory_space<vmem>>, vector<8x128xf32>
    tpu.vector_store %arg8[%c0_17, %c0_18], %22 {strides = array<i32>} : memref<8x128xf32, #tpu.memory_space<vmem>>, vector<8x128xf32>,
    return
  }
  func.func @transform_0(%arg0: i32) -> (i32, i32) {
    %c0_i32 = arith.constant 0 : i32
    %c0_i32_0 = arith.constant 0 : i32
    return %arg0, %c0_i32 : i32, i32
  }
  func.func @transform_1(%arg0: i32) -> (i32, i32) {
    %c0_i32 = arith.constant 0 : i32
    %c0_i32_0 = arith.constant 0 : i32
    %c0_i32_1 = arith.constant 0 : i32
    return %c0_i32, %c0_i32_0 : i32, i32
  }
  func.func @transform_2(%arg0: i32) -> (i32, i32) {
    %c0_i32 = arith.constant 0 : i32
    %c0_i32_0 = arith.constant 0 : i32
    %c0_i32_1 = arith.constant 0 : i32
    return %c0_i32, %c0_i32_0 : i32, i32
  }
  func.func @transform_3(%arg0: i32) -> (i32, i32) {
    %c0_i32 = arith.constant 0 : i32
    %c0_i32_0 = arith.constant 0 : i32
    %c0_i32_1 = arith.constant 0 : i32
    return %c0_i32, %c0_i32_0 : i32, i32
  }
  func.func @transform_4(%arg0: i32) -> (i32, i32) {
    %c0_i32 = arith.constant 0 : i32
    %c0_i32_0 = arith.constant 0 : i32
    %c0_i32_1 = arith.constant 0 : i32
    return %c0_i32, %c0_i32_0 : i32, i32
  }
  func.func @transform_5(%arg0: i32) -> (i32, i32) {
    %c0_i32 = arith.constant 0 : i32
    %c0_i32_0 = arith.constant 0 : i32
    %c0_i32_1 = arith.constant 0 : i32
    return %c0_i32, %c0_i32_0 : i32, i32
  }
  func.func @transform_6(%arg0: i32) -> (i32, i32) {
    %c0_i32 = arith.constant 0 : i32
    %c0_i32_0 = arith.constant 0 : i32
    %c0_i32_1 = arith.constant 0 : i32
    return %c0_i32, %c0_i32_0 : i32, i32
  }
  func.func @transform_7(%arg0: i32) -> (i32, i32) {
    %c0_i32 = arith.constant 0 : i32
    %c0_i32_0 = arith.constant 0 : i32
    return %arg0, %c0_i32 : i32, i32
  }
}

</mosaic_0001>

<llo_original>
// kernel: mlp_readout_forward.1
$region0: #{mlp_readout_forward.1}
  #allocation0 [shape = 'u32[]', space=smem, size = 0x4, offset = 0x4, fixed_abs, tag = 'smem constant byte address 0x4 - core index']
  #allocation1 [shape = 'u32[72,128]{1,0:T(1,128)}', space=vmem, size = 0x9000, scoped, tag = 'internal scratch']
  %s0 = inlined_call_operand.hbm [shape: f32[8,256], index: 0, kind: input, shape index: {}]
  %s1 = inlined_call_operand.hbm [shape: bf16[256,1024], index: 1, kind: input, shape index: {}]
  %s2 = inlined_call_operand.hbm [shape: f32[1,1024], index: 2, kind: input, shape index: {}]
  %s3 = inlined_call_operand.hbm [shape: bf16[1024,512], index: 3, kind: input, shape index: {}]
  %s4 = inlined_call_operand.hbm [shape: f32[1,512], index: 4, kind: input, shape index: {}]
  %s5 = inlined_call_operand.hbm [shape: bf16[512,128], index: 5, kind: input, shape index: {}]
  %s6 = inlined_call_operand.vmem [shape: f32[1,128], index: 6, kind: input, shape index: {}]
  %s7 = inlined_call_operand.hbm [shape: f32[8,128], index: 7, kind: output, shape index: {}]
  %s8 = sld [smem:[#allocation0]]
  $region62: #{mlp_readout_forward.1} parent=0
    _
  %s10 = ssub.s32 1, %s8
  %s11 = scalar_select 0, %s10, %s8
  $region1: #{mlp_readout_forward.1} parent=0
    #allocation2 [shape = 'u8[8192]{0}', space=vmem, size = 0x2000, scoped, tag = 'input window, operand 0, single buffered']
    #allocation3 [shape = 's32[1]{0}', space=sflag, size = 0x4, scoped, tag = 'scoped memory for mlp_readout_forward.1']
    #allocation4 [shape = 's32[1]{0}', space=sflag, size = 0x4, scoped, tag = 'scoped memory for mlp_readout_forward.1']
    #allocation5 [shape = 'u8[524288]{0}', space=vmem, size = 0x80000, scoped, tag = 'input window, operand 1, single buffered']
    #allocation6 [shape = 's32[1]{0}', space=sflag, size = 0x4, scoped, tag = 'scoped memory for mlp_readout_forward.1']
    #allocation7 [shape = 'u8[4096]{0}', space=vmem, size = 0x1000, scoped, tag = 'input window, operand 2, single buffered']
    #allocation8 [shape = 'u8[1048576]{0}', space=vmem, size = 0x100000, scoped, tag = 'input window, operand 3, single buffered']
    #allocation9 [shape = 's32[1]{0}', space=sflag, size = 0x4, scoped, tag = 'scoped memory for mlp_readout_forward.1']
    #allocation10 [shape = 'u8[2048]{0}', space=vmem, size = 0x800, scoped, tag = 'input window, operand 4, single buffered']
    #allocation11 [shape = 'u8[131072]{0}', space=vmem, size = 0x20000, scoped, tag = 'input window, operand 5, single buffered']
    #allocation12 [shape = 's32[1]{0}', space=sflag, size = 0x4, scoped, tag = 'scoped memory for mlp_readout_forward.1']
    #allocation13 [shape = 'u8[4096]{0}', space=vmem, size = 0x1000, scoped, tag = 'output window, operand 0, single buffered']
    %12 = vsyncpa [#allocation3], 0
    %13 = vsyncpa [#allocation6], 0
    %14 = vsyncpa [#allocation9], 0
    %15 = vsyncpa [#allocation12], 0
    %16 = vsyncpa [#allocation4], 0
    // Predicated region
    $region2: #{mlp_readout_forward.1} parent=1 // pred_check
      _
    $region3: #{mlp_readout_forward.1} parent=1 // pred_check_branch
      %18 = sbr.rel (0) target = $region5
    $region4: #{mlp_readout_forward.1} parent=1 // pred_region
      %20 = vsyncadd [#allocation3], 0
      %s22 = sshll.u32 %s0, 4
      %s23 = int_to_ptr.hbm [resolvable:$true] %s22
      %s24 = sshll.u32 [#allocation2], 4
      %s25 = int_to_ptr.vmem [resolvable:$true] %s24
      %27 = dma.hbm_to_vmem [thread:$0]  %s23, 256, %s25, [#allocation3]
    $region5: #{mlp_readout_forward.1} parent=1 // pred_fallthru
      _
    // Predicated region
    $region6: #{mlp_readout_forward.1} parent=1 // pred_check
      _
    $region7: #{mlp_readout_forward.1} parent=1 // pred_check_branch
      %29 = sbr.rel (0) target = $region9
    $region8: #{mlp_readout_forward.1} parent=1 // pred_region
      %31 = vsyncadd [#allocation6], 0
      %s32 = sshll.u32 %s1, 4
      %s33 = int_to_ptr.hbm [resolvable:$true] %s32
      %s34 = sshll.u32 [#allocation5], 4
      %s35 = int_to_ptr.vmem [resolvable:$true] %s34
      %40 = dma.hbm_to_vmem [thread:$0]  %s33, 16384, %s35, [#allocation6], 512, 512, 32
    $region9: #{mlp_readout_forward.1} parent=1 // pred_fallthru
      _
    // Predicated region
    $region10: #{mlp_readout_forward.1} parent=1 // pred_check
      _
    $region11: #{mlp_readout_forward.1} parent=1 // pred_check_branch
      %42 = sbr.rel (0) target = $region13
    $region12: #{mlp_readout_forward.1} parent=1 // pred_region
      %44 = vsyncadd [#allocation6], 0
      %s46 = sshll.u32 %s2, 4
      %s47 = int_to_ptr.hbm [resolvable:$true] %s46
      %s48 = sshll.u32 [#allocation7], 4
      %s49 = int_to_ptr.vmem [resolvable:$true] %s48
      %51 = dma.hbm_to_vmem [thread:$0]  %s47, 128, %s49, [#allocation6]
    $region13: #{mlp_readout_forward.1} parent=1 // pred_fallthru
      _
    // Predicated region
    $region14: #{mlp_readout_forward.1} parent=1 // pred_check
      _
    $region15: #{mlp_readout_forward.1} parent=1 // pred_check_branch
      %53 = sbr.rel (0) target = $region17
    $region16: #{mlp_readout_forward.1} parent=1 // pred_region
      %55 = vsyncadd [#allocation9], 0
      %s56 = sshll.u32 %s3, 4
      %s57 = int_to_ptr.hbm [resolvable:$true] %s56
      %s58 = sshll.u32 [#allocation8], 4
      %s59 = int_to_ptr.vmem [resolvable:$true] %s58
      %64 = dma.hbm_to_vmem [thread:$0]  %s57, 32768, %s59, [#allocation9], 256, 256, 16
    $region17: #{mlp_readout_forward.1} parent=1 // pred_fallthru
      _
    // Predicated region
    $region18: #{mlp_readout_forward.1} parent=1 // pred_check
      _
    $region19: #{mlp_readout_forward.1} parent=1 // pred_check_branch
      %66 = sbr.rel (0) target = $region21
    $region20: #{mlp_readout_forward.1} parent=1 // pred_region
      %68 = vsyncadd [#allocation9], 0
      %s70 = sshll.u32 %s4, 4
      %s71 = int_to_ptr.hbm [resolvable:$true] %s70
      %s72 = sshll.u32 [#allocation10], 4
      %s73 = int_to_ptr.vmem [resolvable:$true] %s72
      %75 = dma.hbm_to_vmem [thread:$0]  %s71, 64, %s73, [#allocation9]
    $region21: #{mlp_readout_forward.1} parent=1 // pred_fallthru
      _
    // Predicated region
    $region22: #{mlp_readout_forward.1} parent=1 // pred_check
      _
    $region23: #{mlp_readout_forward.1} parent=1 // pred_check_branch
      %77 = sbr.rel (0) target = $region25
    $region24: #{mlp_readout_forward.1} parent=1 // pred_region
      %79 = vsyncadd [#allocation12], 0
      %s80 = sshll.u32 %s5, 4
      %s81 = int_to_ptr.hbm [resolvable:$true] %s80
      %s82 = sshll.u32 [#allocation11], 4
      %s83 = int_to_ptr.vmem [resolvable:$true] %s82
      %88 = dma.hbm_to_vmem [thread:$0]  %s81, 4096, %s83, [#allocation12], 64, 64, 4
    $region25: #{mlp_readout_forward.1} parent=1 // pred_fallthru
      _
    // Predicated region
    $region26: #{mlp_readout_forward.1} parent=1 // pred_check
      _
    $region27: #{mlp_readout_forward.1} parent=1 // pred_check_branch
      %90 = sbr.rel (0) target = $region29
    $region28: #{mlp_readout_forward.1} parent=1 // pred_region
      _
    $region29: #{mlp_readout_forward.1} parent=1 // pred_fallthru
      _
    // Predicated region
    $region30: #{mlp_readout_forward.1} parent=1 // pred_check
      _
    $region31: #{mlp_readout_forward.1} parent=1 // pred_check_branch
      %92 = sbr.rel (0) target = $region33
    $region32: #{mlp_readout_forward.1} parent=1 // pred_region
      %94 = dma.done [#allocation3], 256
    $region33: #{mlp_readout_forward.1} parent=1 // pred_fallthru
      _
    // Predicated region
    $region34: #{mlp_readout_forward.1} parent=1 // pred_check
      _
    $region35: #{mlp_readout_forward.1} parent=1 // pred_check_branch
      %96 = sbr.rel (0) target = $region37
    $region36: #{mlp_readout_forward.1} parent=1 // pred_region
      %98 = dma.done [#allocation6], 16384
    $region37: #{mlp_readout_forward.1} parent=1 // pred_fallthru
      _
    // Predicated region
    $region38: #{mlp_readout_forward.1} parent=1 // pred_check
      _
    $region39: #{mlp_readout_forward.1} parent=1 // pred_check_branch
      %100 = sbr.rel (0) target = $region41
    $region40: #{mlp_readout_forward.1} parent=1 // pred_region
      %102 = dma.done [#allocation6], 128
    $region41: #{mlp_readout_forward.1} parent=1 // pred_fallthru
      _
    // Predicated region
    $region42: #{mlp_readout_forward.1} parent=1 // pred_check
      _
    $region43: #{mlp_readout_forward.1} parent=1 // pred_check_branch
      %104 = sbr.rel (0) target = $region45
    $region44: #{mlp_readout_forward.1} parent=1 // pred_region
      %106 = dma.done [#allocation9], 32768
    $region45: #{mlp_readout_forward.1} parent=1 // pred_fallthru
      _
    // Predicated region
    $region46: #{mlp_readout_forward.1} parent=1 // pred_check
      _
    $region47: #{mlp_readout_forward.1} parent=1 // pred_check_branch
      %108 = sbr.rel (0) target = $region49
    $region48: #{mlp_readout_forward.1} parent=1 // pred_region
      %110 = dma.done [#allocation9], 64
    $region49: #{mlp_readout_forward.1} parent=1 // pred_fallthru
      _
    // Predicated region
    $region50: #{mlp_readout_forward.1} parent=1 // pred_check
      _
    $region51: #{mlp_readout_forward.1} parent=1 // pred_check_branch
      %112 = sbr.rel (0) target = $region53
    $region52: #{mlp_readout_forward.1} parent=1 // pred_region
      %114 = dma.done [#allocation12], 4096
    $region53: #{mlp_readout_forward.1} parent=1 // pred_fallthru
      _
    %v115 = vld [vmem:[#allocation2] sm:$0xff]
    %v116 = vld [vmem:[#allocation2 + $0x8] sm:$0xff]
    %v117 = vpack.c.bf16 %v115, %v115
    %v118 = vpack.c.bf16 %v116, %v116
    %v119 = vld [vmem:[#allocation5] sm:$0xff]
    %v120 = vld [vmem:[#allocation5 + $0x8] sm:$0xff]
    %v121 = vld [vmem:[#allocation5 + $0x10] sm:$0xff]
    %v122 = vld [vmem:[#allocation5 + $0x18] sm:$0xff]
    %v123 = vld [vmem:[#allocation5 + $0x20] sm:$0xff]
    %v124 = vld [vmem:[#allocation5 + $0x28] sm:$0xff]
    %v125 = vld [vmem:[#allocation5 + $0x30] sm:$0xff]
    %v126 = vld [vmem:[#allocation5 + $0x38] sm:$0xff]
    %v127 = vld [vmem:[#allocation5 + $0x40] sm:$0xff]
    %v128 = vld [vmem:[#allocation5 + $0x48] sm:$0xff]
    %v129 = vld [vmem:[#allocation5 + $0x50] sm:$0xff]
    %v130 = vld [vmem:[#allocation5 + $0x58] sm:$0xff]
    %v131 = vld [vmem:[#allocation5 + $0x60] sm:$0xff]
    %v132 = vld [vmem:[#allocation5 + $0x68] sm:$0xff]
    %v133 = vld [vmem:[#allocation5 + $0x70] sm:$0xff]
    %v134 = vld [vmem:[#allocation5 + $0x78] sm:$0xff]
    %v135 = vld [vmem:[#allocation5 + $0x80] sm:$0xff]
    %v136 = vld [vmem:[#allocation5 + $0x88] sm:$0xff]
    %v137 = vld [vmem:[#allocation5 + $0x90] sm:$0xff]
    %v138 = vld [vmem:[#allocation5 + $0x98] sm:$0xff]
    %v139 = vld [vmem:[#allocation5 + $0xa0] sm:$0xff]
    %v140 = vld [vmem:[#allocation5 + $0xa8] sm:$0xff]
    %v141 = vld [vmem:[#allocation5 + $0xb0] sm:$0xff]
    %v142 = vld [vmem:[#allocation5 + $0xb8] sm:$0xff]
    %v143 = vld [vmem:[#allocation5 + $0xc0] sm:$0xff]
    %v144 = vld [vmem:[#allocation5 + $0xc8] sm:$0xff]
    %v145 = vld [vmem:[#allocation5 + $0xd0] sm:$0xff]
    %v146 = vld [vmem:[#allocation5 + $0xd8] sm:$0xff]
    %v147 = vld [vmem:[#allocation5 + $0xe0] sm:$0xff]
    %v148 = vld [vmem:[#allocation5 + $0xe8] sm:$0xff]
    %v149 = vld [vmem:[#allocation5 + $0xf0] sm:$0xff]
    %v150 = vld [vmem:[#allocation5 + $0xf8] sm:$0xff]
    %v151 = vld [vmem:[#allocation5 + $0x100] sm:$0xff]
    %v152 = vld [vmem:[#allocation5 + $0x108] sm:$0xff]
    %v153 = vld [vmem:[#allocation5 + $0x110] sm:$0xff]
    %v154 = vld [vmem:[#allocation5 + $0x118] sm:$0xff]
    %v155 = vld [vmem:[#allocation5 + $0x120] sm:$0xff]
    %v156 = vld [vmem:[#allocation5 + $0x128] sm:$0xff]
    %v157 = vld [vmem:[#allocation5 + $0x130] sm:$0xff]
    %v158 = vld [vmem:[#allocation5 + $0x138] sm:$0xff]
    %v159 = vld [vmem:[#allocation5 + $0x140] sm:$0xff]
    %v160 = vld [vmem:[#allocation5 + $0x148] sm:$0xff]
    %v161 = vld [vmem:[#allocation5 + $0x150] sm:$0xff]
    %v162 = vld [vmem:[#allocation5 + $0x158] sm:$0xff]
    %v163 = vld [vmem:[#allocation5 + $0x160] sm:$0xff]
    %v164 = vld [vmem:[#allocation5 + $0x168] sm:$0xff]
    %v165 = vld [vmem:[#allocation5 + $0x170] sm:$0xff]
    %v166 = vld [vmem:[#allocation5 + $0x178] sm:$0xff]
    %v167 = vld [vmem:[#allocation5 + $0x180] sm:$0xff]
    %v168 = vld [vmem:[#allocation5 + $0x188] sm:$0xff]
    %v169 = vld [vmem:[#allocation5 + $0x190] sm:$0xff]
    %v170 = vld [vmem:[#allocation5 + $0x198] sm:$0xff]
    %v171 = vld [vmem:[#allocation5 + $0x1a0] sm:$0xff]
    %v172 = vld [vmem:[#allocation5 + $0x1a8] sm:$0xff]
    %v173 = vld [vmem:[#allocation5 + $0x1b0] sm:$0xff]
    %v174 = vld [vmem:[#allocation5 + $0x1b8] sm:$0xff]
    %v175 = vld [vmem:[#allocation5 + $0x1c0] sm:$0xff]
    %v176 = vld [vmem:[#allocation5 + $0x1c8] sm:$0xff]
    %v177 = vld [vmem:[#allocation5 + $0x1d0] sm:$0xff]
    %v178 = vld [vmem:[#allocation5 + $0x1d8] sm:$0xff]
    %v179 = vld [vmem:[#allocation5 + $0x1e0] sm:$0xff]
    %v180 = vld [vmem:[#allocation5 + $0x1e8] sm:$0xff]
    %v181 = vld [vmem:[#allocation5 + $0x1f0] sm:$0xff]
    %v182 = vld [vmem:[#allocation5 + $0x1f8] sm:$0xff]
    %v183 = vld [vmem:[#allocation5 + $0x200] sm:$0xff]
    %v184 = vld [vmem:[#allocation5 + $0x208] sm:$0xff]
    %v185 = vld [vmem:[#allocation5 + $0x210] sm:$0xff]
    %v186 = vld [vmem:[#allocation5 + $0x218] sm:$0xff]
    %v187 = vld [vmem:[#allocation5 + $0x220] sm:$0xff]
    %v188 = vld [vmem:[#allocation5 + $0x228] sm:$0xff]
    %v189 = vld [vmem:[#allocation5 + $0x230] sm:$0xff]
    %v190 = vld [vmem:[#allocation5 + $0x238] sm:$0xff]
    %v191 = vld [vmem:[#allocation5 + $0x240] sm:$0xff]
    %v192 = vld [vmem:[#allocation5 + $0x248] sm:$0xff]
    %v193 = vld [vmem:[#allocation5 + $0x250] sm:$0xff]
    %v194 = vld [vmem:[#allocation5 + $0x258] sm:$0xff]
    %v195 = vld [vmem:[#allocation5 + $0x260] sm:$0xff]
    %v196 = vld [vmem:[#allocation5 + $0x268] sm:$0xff]
    %v197 = vld [vmem:[#allocation5 + $0x270] sm:$0xff]
    %v198 = vld [vmem:[#allocation5 + $0x278] sm:$0xff]
    %v199 = vld [vmem:[#allocation5 + $0x280] sm:$0xff]
    %v200 = vld [vmem:[#allocation5 + $0x288] sm:$0xff]
    %v201 = vld [vmem:[#allocation5 + $0x290] sm:$0xff]
    %v202 = vld [vmem:[#allocation5 + $0x298] sm:$0xff]
    %v203 = vld [vmem:[#allocation5 + $0x2a0] sm:$0xff]
    %v204 = vld [vmem:[#allocation5 + $0x2a8] sm:$0xff]
    %v205 = vld [vmem:[#allocation5 + $0x2b0] sm:$0xff]
    %v206 = vld [vmem:[#allocation5 + $0x2b8] sm:$0xff]
    %v207 = vld [vmem:[#allocation5 + $0x2c0] sm:$0xff]
    %v208 = vld [vmem:[#allocation5 + $0x2c8] sm:$0xff]
    %v209 = vld [vmem:[#allocation5 + $0x2d0] sm:$0xff]
    %v210 = vld [vmem:[#allocation5 + $0x2d8] sm:$0xff]
    %v211 = vld [vmem:[#allocation5 + $0x2e0] sm:$0xff]
    %v212 = vld [vmem:[#allocation5 + $0x2e8] sm:$0xff]
    %v213 = vld [vmem:[#allocation5 + $0x2f0] sm:$0xff]
    %v214 = vld [vmem:[#allocation5 + $0x2f8] sm:$0xff]
    %v215 = vld [vmem:[#allocation5 + $0x300] sm:$0xff]
    %v216 = vld [vmem:[#allocation5 + $0x308] sm:$0xff]
    %v217 = vld [vmem:[#allocation5 + $0x310] sm:$0xff]
    %v218 = vld [vmem:[#allocation5 + $0x318] sm:$0xff]
    %v219 = vld [vmem:[#allocation5 + $0x320] sm:$0xff]
    %v220 = vld [vmem:[#allocation5 + $0x328] sm:$0xff]
    %v221 = vld [vmem:[#allocation5 + $0x330] sm:$0xff]
    %v222 = vld [vmem:[#allocation5 + $0x338] sm:$0xff]
    %v223 = vld [vmem:[#allocation5 + $0x340] sm:$0xff]
    %v224 = vld [vmem:[#allocation5 + $0x348] sm:$0xff]
    %v225 = vld [vmem:[#allocation5 + $0x350] sm:$0xff]
    %v226 = vld [vmem:[#allocation5 + $0x358] sm:$0xff]
    %v227 = vld [vmem:[#allocation5 + $0x360] sm:$0xff]
    %v228 = vld [vmem:[#allocation5 + $0x368] sm:$0xff]
    %v229 = vld [vmem:[#allocation5 + $0x370] sm:$0xff]
    %v230 = vld [vmem:[#allocation5 + $0x378] sm:$0xff]
    %v231 = vld [vmem:[#allocation5 + $0x380] sm:$0xff]
    %v232 = vld [vmem:[#allocation5 + $0x388] sm:$0xff]
    %v233 = vld [vmem:[#allocation5 + $0x390] sm:$0xff]
    %v234 = vld [vmem:[#allocation5 + $0x398] sm:$0xff]
    %v235 = vld [vmem:[#allocation5 + $0x3a0] sm:$0xff]
    %v236 = vld [vmem:[#allocation5 + $0x3a8] sm:$0xff]
    %v237 = vld [vmem:[#allocation5 + $0x3b0] sm:$0xff]
    %v238 = vld [vmem:[#allocation5 + $0x3b8] sm:$0xff]
    %v239 = vld [vmem:[#allocation5 + $0x3c0] sm:$0xff]
    %v240 = vld [vmem:[#allocation5 + $0x3c8] sm:$0xff]
    %v241 = vld [vmem:[#allocation5 + $0x3d0] sm:$0xff]
    %v242 = vld [vmem:[#allocation5 + $0x3d8] sm:$0xff]
    %v243 = vld [vmem:[#allocation5 + $0x3e0] sm:$0xff]
    %v244 = vld [vmem:[#allocation5 + $0x3e8] sm:$0xff]
    %v245 = vld [vmem:[#allocation5 + $0x3f0] sm:$0xff]
    %v246 = vld [vmem:[#allocation5 + $0x3f8] sm:$0xff]
    %v247 = vld [vmem:[#allocation7] sm:$0xff]
    %v249 = vperm.slane %v247, 0
    %v250 = vperm.slane %v247, 1
    %v251 = vperm.slane %v247, 2
    %v252 = vperm.slane %v247, 3
    %v253 = vperm.slane %v247, 4
    %v254 = vperm.slane %v247, 5
    %v255 = vperm.slane %v247, 6
    %v256 = vperm.slane %v247, 7
    %v393 = vunpack.c.l.b16 %v119
    %v394 = vunpack.c.h.b16 %v119
    %v395 = vunpack.c.l.b16 %v120
    %v396 = vunpack.c.h.b16 %v120
    %v397 = vunpack.c.l.b16 %v121
    %v398 = vunpack.c.h.b16 %v121
    %v399 = vunpack.c.l.b16 %v122
    %v400 = vunpack.c.h.b16 %v122
    %v401 = vunpack.c.l.b16 %v123
    %v402 = vunpack.c.h.b16 %v123
    %v403 = vunpack.c.l.b16 %v124
    %v404 = vunpack.c.h.b16 %v124
    %v405 = vunpack.c.l.b16 %v125
    %v406 = vunpack.c.h.b16 %v125
    %v407 = vunpack.c.l.b16 %v126
    %v408 = vunpack.c.h.b16 %v126
    %v409 = vunpack.c.l.b16 %v127
    %v410 = vunpack.c.h.b16 %v127
    %v411 = vunpack.c.l.b16 %v128
    %v412 = vunpack.c.h.b16 %v128
    %v413 = vunpack.c.l.b16 %v129
    %v414 = vunpack.c.h.b16 %v129
    %v415 = vunpack.c.l.b16 %v130
    %v416 = vunpack.c.h.b16 %v130
    %v417 = vunpack.c.l.b16 %v131
    %v418 = vunpack.c.h.b16 %v131
    %v419 = vunpack.c.l.b16 %v132
    %v420 = vunpack.c.h.b16 %v132
    %v421 = vunpack.c.l.b16 %v133
    %v422 = vunpack.c.h.b16 %v133
    %v423 = vunpack.c.l.b16 %v134
    %v424 = vunpack.c.h.b16 %v134
    %v425 = vunpack.c.l.b16 %v135
    %v426 = vunpack.c.h.b16 %v135
    %v427 = vunpack.c.l.b16 %v136
    %v428 = vunpack.c.h.b16 %v136
    %v429 = vunpack.c.l.b16 %v137
    %v430 = vunpack.c.h.b16 %v137
    %v431 = vunpack.c.l.b16 %v138
    %v432 = vunpack.c.h.b16 %v138
    %v433 = vunpack.c.l.b16 %v139
    %v434 = vunpack.c.h.b16 %v139
    %v435 = vunpack.c.l.b16 %v140
    %v436 = vunpack.c.h.b16 %v140
    %v437 = vunpack.c.l.b16 %v141
    %v438 = vunpack.c.h.b16 %v141
    %v439 = vunpack.c.l.b16 %v142
    %v440 = vunpack.c.h.b16 %v142
    %v441 = vunpack.c.l.b16 %v143
    %v442 = vunpack.c.h.b16 %v143
    %v443 = vunpack.c.l.b16 %v144
    %v444 = vunpack.c.h.b16 %v144
    %v445 = vunpack.c.l.b16 %v145
    %v446 = vunpack.c.h.b16 %v145
    %v447 = vunpack.c.l.b16 %v146
    %v448 = vunpack.c.h.b16 %v146
    %v449 = vunpack.c.l.b16 %v147
    %v450 = vunpack.c.h.b16 %v147
    %v451 = vunpack.c.l.b16 %v148
    %v452 = vunpack.c.h.b16 %v148
    %v453 = vunpack.c.l.b16 %v149
    %v454 = vunpack.c.h.b16 %v149
    %v455 = vunpack.c.l.b16 %v150
    %v456 = vunpack.c.h.b16 %v150
    %v457 = vunpack.c.l.b16 %v151
    %v458 = vunpack.c.h.b16 %v151
    %v459 = vunpack.c.l.b16 %v152
    %v460 = vunpack.c.h.b16 %v152
    %v461 = vunpack.c.l.b16 %v153
    %v462 = vunpack.c.h.b16 %v153
    %v463 = vunpack.c.l.b16 %v154
    %v464 = vunpack.c.h.b16 %v154
    %v465 = vunpack.c.l.b16 %v155
    %v466 = vunpack.c.h.b16 %v155
    %v467 = vunpack.c.l.b16 %v156
    %v468 = vunpack.c.h.b16 %v156
    %v469 = vunpack.c.l.b16 %v157
    %v470 = vunpack.c.h.b16 %v157
    %v471 = vunpack.c.l.b16 %v158
    %v472 = vunpack.c.h.b16 %v158
    %v473 = vunpack.c.l.b16 %v159
    %v474 = vunpack.c.h.b16 %v159
    %v475 = vunpack.c.l.b16 %v160
    %v476 = vunpack.c.h.b16 %v160
    %v477 = vunpack.c.l.b16 %v161
    %v478 = vunpack.c.h.b16 %v161
    %v479 = vunpack.c.l.b16 %v162
    %v480 = vunpack.c.h.b16 %v162
    %v481 = vunpack.c.l.b16 %v163
    %v482 = vunpack.c.h.b16 %v163
    %v483 = vunpack.c.l.b16 %v164
    %v484 = vunpack.c.h.b16 %v164
    %v485 = vunpack.c.l.b16 %v165
    %v486 = vunpack.c.h.b16 %v165
    %v487 = vunpack.c.l.b16 %v166
    %v488 = vunpack.c.h.b16 %v166
    %v489 = vunpack.c.l.b16 %v167
    %v490 = vunpack.c.h.b16 %v167
    %v491 = vunpack.c.l.b16 %v168
    %v492 = vunpack.c.h.b16 %v168
    %v493 = vunpack.c.l.b16 %v169
    %v494 = vunpack.c.h.b16 %v169
    %v495 = vunpack.c.l.b16 %v170
    %v496 = vunpack.c.h.b16 %v170
    %v497 = vunpack.c.l.b16 %v171
    %v498 = vunpack.c.h.b16 %v171
    %v499 = vunpack.c.l.b16 %v172
    %v500 = vunpack.c.h.b16 %v172
    %v501 = vunpack.c.l.b16 %v173
    %v502 = vunpack.c.h.b16 %v173
    %v503 = vunpack.c.l.b16 %v174
    %v504 = vunpack.c.h.b16 %v174
    %v505 = vunpack.c.l.b16 %v175
    %v506 = vunpack.c.h.b16 %v175
    %v507 = vunpack.c.l.b16 %v176
    %v508 = vunpack.c.h.b16 %v176
    %v509 = vunpack.c.l.b16 %v177
    %v510 = vunpack.c.h.b16 %v177
    %v511 = vunpack.c.l.b16 %v178
    %v512 = vunpack.c.h.b16 %v178
    %v513 = vunpack.c.l.b16 %v179
    %v514 = vunpack.c.h.b16 %v179
    %v515 = vunpack.c.l.b16 %v180
    %v516 = vunpack.c.h.b16 %v180
    %v517 = vunpack.c.l.b16 %v181
    %v518 = vunpack.c.h.b16 %v181
    %v519 = vunpack.c.l.b16 %v182
    %v520 = vunpack.c.h.b16 %v182
    %v521 = vunpack.c.l.b16 %v183
    %v522 = vunpack.c.h.b16 %v183
    %v523 = vunpack.c.l.b16 %v184
    %v524 = vunpack.c.h.b16 %v184
    %v525 = vunpack.c.l.b16 %v185
    %v526 = vunpack.c.h.b16 %v185
    %v527 = vunpack.c.l.b16 %v186
    %v528 = vunpack.c.h.b16 %v186
    %v529 = vunpack.c.l.b16 %v187
    %v530 = vunpack.c.h.b16 %v187
    %v531 = vunpack.c.l.b16 %v188
    %v532 = vunpack.c.h.b16 %v188
    %v533 = vunpack.c.l.b16 %v189
    %v534 = vunpack.c.h.b16 %v189
    %v535 = vunpack.c.l.b16 %v190
    %v536 = vunpack.c.h.b16 %v190
    %v537 = vunpack.c.l.b16 %v191
    %v538 = vunpack.c.h.b16 %v191
    %v539 = vunpack.c.l.b16 %v192
    %v540 = vunpack.c.h.b16 %v192
    %v541 = vunpack.c.l.b16 %v193
    %v542 = vunpack.c.h.b16 %v193
    %v543 = vunpack.c.l.b16 %v194
    %v544 = vunpack.c.h.b16 %v194
    %v545 = vunpack.c.l.b16 %v195
    %v546 = vunpack.c.h.b16 %v195
    %v547 = vunpack.c.l.b16 %v196
    %v548 = vunpack.c.h.b16 %v196
    %v549 = vunpack.c.l.b16 %v197
    %v550 = vunpack.c.h.b16 %v197
    %v551 = vunpack.c.l.b16 %v198
    %v552 = vunpack.c.h.b16 %v198
    %v553 = vunpack.c.l.b16 %v199
    %v554 = vunpack.c.h.b16 %v199
    %v555 = vunpack.c.l.b16 %v200
    %v556 = vunpack.c.h.b16 %v200
    %v557 = vunpack.c.l.b16 %v201
    %v558 = vunpack.c.h.b16 %v201
    %v559 = vunpack.c.l.b16 %v202
    %v560 = vunpack.c.h.b16 %v202
    %v561 = vunpack.c.l.b16 %v203
    %v562 = vunpack.c.h.b16 %v203
    %v563 = vunpack.c.l.b16 %v204
    %v564 = vunpack.c.h.b16 %v204
    %v565 = vunpack.c.l.b16 %v205
    %v566 = vunpack.c.h.b16 %v205
    %v567 = vunpack.c.l.b16 %v206
    %v568 = vunpack.c.h.b16 %v206
    %v569 = vunpack.c.l.b16 %v207
    %v570 = vunpack.c.h.b16 %v207
    %v571 = vunpack.c.l.b16 %v208
    %v572 = vunpack.c.h.b16 %v208
    %v573 = vunpack.c.l.b16 %v209
    %v574 = vunpack.c.h.b16 %v209
    %v575 = vunpack.c.l.b16 %v210
    %v576 = vunpack.c.h.b16 %v210
    %v577 = vunpack.c.l.b16 %v211
    %v578 = vunpack.c.h.b16 %v211
    %v579 = vunpack.c.l.b16 %v212
    %v580 = vunpack.c.h.b16 %v212
    %v581 = vunpack.c.l.b16 %v213
    %v582 = vunpack.c.h.b16 %v213
    %v583 = vunpack.c.l.b16 %v214
    %v584 = vunpack.c.h.b16 %v214
    %v585 = vunpack.c.l.b16 %v215
    %v586 = vunpack.c.h.b16 %v215
    %v587 = vunpack.c.l.b16 %v216
    %v588 = vunpack.c.h.b16 %v216
    %v589 = vunpack.c.l.b16 %v217
    %v590 = vunpack.c.h.b16 %v217
    %v591 = vunpack.c.l.b16 %v218
    %v592 = vunpack.c.h.b16 %v218
    %v593 = vunpack.c.l.b16 %v219
    %v594 = vunpack.c.h.b16 %v219
    %v595 = vunpack.c.l.b16 %v220
    %v596 = vunpack.c.h.b16 %v220
    %v597 = vunpack.c.l.b16 %v221
    %v598 = vunpack.c.h.b16 %v221
    %v599 = vunpack.c.l.b16 %v222
    %v600 = vunpack.c.h.b16 %v222
    %v601 = vunpack.c.l.b16 %v223
    %v602 = vunpack.c.h.b16 %v223
    %v603 = vunpack.c.l.b16 %v224
    %v604 = vunpack.c.h.b16 %v224
    %v605 = vunpack.c.l.b16 %v225
    %v606 = vunpack.c.h.b16 %v225
    %v607 = vunpack.c.l.b16 %v226
    %v608 = vunpack.c.h.b16 %v226
    %v609 = vunpack.c.l.b16 %v227
    %v610 = vunpack.c.h.b16 %v227
    %v611 = vunpack.c.l.b16 %v228
    %v612 = vunpack.c.h.b16 %v228
    %v613 = vunpack.c.l.b16 %v229
    %v614 = vunpack.c.h.b16 %v229
    %v615 = vunpack.c.l.b16 %v230
    %v616 = vunpack.c.h.b16 %v230
    %v617 = vunpack.c.l.b16 %v231
    %v618 = vunpack.c.h.b16 %v231
    %v619 = vunpack.c.l.b16 %v232
    %v620 = vunpack.c.h.b16 %v232
    %v621 = vunpack.c.l.b16 %v233
    %v622 = vunpack.c.h.b16 %v233
    %v623 = vunpack.c.l.b16 %v234
    %v624 = vunpack.c.h.b16 %v234
    %v625 = vunpack.c.l.b16 %v235
    %v626 = vunpack.c.h.b16 %v235
    %v627 = vunpack.c.l.b16 %v236
    %v628 = vunpack.c.h.b16 %v236
    %v629 = vunpack.c.l.b16 %v237
    %v630 = vunpack.c.h.b16 %v237
    %v631 = vunpack.c.l.b16 %v238
    %v632 = vunpack.c.h.b16 %v238
    %v633 = vunpack.c.l.b16 %v239
    %v634 = vunpack.c.h.b16 %v239
    %v635 = vunpack.c.l.b16 %v240
    %v636 = vunpack.c.h.b16 %v240
    %v637 = vunpack.c.l.b16 %v241
    %v638 = vunpack.c.h.b16 %v241
    %v639 = vunpack.c.l.b16 %v242
    %v640 = vunpack.c.h.b16 %v242
    %v641 = vunpack.c.l.b16 %v243
    %v642 = vunpack.c.h.b16 %v243
    %v643 = vunpack.c.l.b16 %v244
    %v644 = vunpack.c.h.b16 %v244
    %v645 = vunpack.c.l.b16 %v245
    %v646 = vunpack.c.h.b16 %v245
    %v647 = vunpack.c.l.b16 %v246
    %v648 = vunpack.c.h.b16 %v246
    %v649 = vpack.c.b16 %v401, %v393
    %v650 = vpack.c.b16 %v402, %v394
    %v651 = vpack.c.b16 %v403, %v395
    %v652 = vpack.c.b16 %v404, %v396
    %v653 = vpack.c.b16 %v405, %v397
    %v654 = vpack.c.b16 %v406, %v398
    %v655 = vpack.c.b16 %v407, %v399
    %v656 = vpack.c.b16 %v408, %v400
    %v657 = vpack.c.b16 %v417, %v409
    %v658 = vpack.c.b16 %v418, %v410
    %v659 = vpack.c.b16 %v419, %v411
    %v660 = vpack.c.b16 %v420, %v412
    %v661 = vpack.c.b16 %v421, %v413
    %v662 = vpack.c.b16 %v422, %v414
    %v663 = vpack.c.b16 %v423, %v415
    %v664 = vpack.c.b16 %v424, %v416
    %v665 = vpack.c.b16 %v433, %v425
    %v666 = vpack.c.b16 %v434, %v426
    %v667 = vpack.c.b16 %v435, %v427
    %v668 = vpack.c.b16 %v436, %v428
    %v669 = vpack.c.b16 %v437, %v429
    %v670 = vpack.c.b16 %v438, %v430
    %v671 = vpack.c.b16 %v439, %v431
    %v672 = vpack.c.b16 %v440, %v432
    %v673 = vpack.c.b16 %v449, %v441
    %v674 = vpack.c.b16 %v450, %v442
    %v675 = vpack.c.b16 %v451, %v443
    %v676 = vpack.c.b16 %v452, %v444
    %v677 = vpack.c.b16 %v453, %v445
    %v678 = vpack.c.b16 %v454, %v446
    %v679 = vpack.c.b16 %v455, %v447
    %v680 = vpack.c.b16 %v456, %v448
    %v681 = vpack.c.b16 %v465, %v457
    %v682 = vpack.c.b16 %v466, %v458
    %v683 = vpack.c.b16 %v467, %v459
    %v684 = vpack.c.b16 %v468, %v460
    %v685 = vpack.c.b16 %v469, %v461
    %v686 = vpack.c.b16 %v470, %v462
    %v687 = vpack.c.b16 %v471, %v463
    %v688 = vpack.c.b16 %v472, %v464
    %v689 = vpack.c.b16 %v481, %v473
    %v690 = vpack.c.b16 %v482, %v474
    %v691 = vpack.c.b16 %v483, %v475
    %v692 = vpack.c.b16 %v484, %v476
    %v693 = vpack.c.b16 %v485, %v477
    %v694 = vpack.c.b16 %v486, %v478
    %v695 = vpack.c.b16 %v487, %v479
    %v696 = vpack.c.b16 %v488, %v480
    %v697 = vpack.c.b16 %v497, %v489
    %v698 = vpack.c.b16 %v498, %v490
    %v699 = vpack.c.b16 %v499, %v491
    %v700 = vpack.c.b16 %v500, %v492
    %v701 = vpack.c.b16 %v501, %v493
    %v702 = vpack.c.b16 %v502, %v494
    %v703 = vpack.c.b16 %v503, %v495
    %v704 = vpack.c.b16 %v504, %v496
    %v705 = vpack.c.b16 %v513, %v505
    %v706 = vpack.c.b16 %v514, %v506
    %v707 = vpack.c.b16 %v515, %v507
    %v708 = vpack.c.b16 %v516, %v508
    %v709 = vpack.c.b16 %v517, %v509
    %v710 = vpack.c.b16 %v518, %v510
    %v711 = vpack.c.b16 %v519, %v511
    %v712 = vpack.c.b16 %v520, %v512
    %v713 = vpack.c.b16 %v529, %v521
    %v714 = vpack.c.b16 %v530, %v522
    %v715 = vpack.c.b16 %v531, %v523
    %v716 = vpack.c.b16 %v532, %v524
    %v717 = vpack.c.b16 %v533, %v525
    %v718 = vpack.c.b16 %v534, %v526
    %v719 = vpack.c.b16 %v535, %v527
    %v720 = vpack.c.b16 %v536, %v528
    %v721 = vpack.c.b16 %v545, %v537
    %v722 = vpack.c.b16 %v546, %v538
    %v723 = vpack.c.b16 %v547, %v539
    %v724 = vpack.c.b16 %v548, %v540
    %v725 = vpack.c.b16 %v549, %v541
    %v726 = vpack.c.b16 %v550, %v542
    %v727 = vpack.c.b16 %v551, %v543
    %v728 = vpack.c.b16 %v552, %v544
    %v729 = vpack.c.b16 %v561, %v553
    %v730 = vpack.c.b16 %v562, %v554
    %v731 = vpack.c.b16 %v563, %v555
    %v732 = vpack.c.b16 %v564, %v556
    %v733 = vpack.c.b16 %v565, %v557
    %v734 = vpack.c.b16 %v566, %v558
    %v735 = vpack.c.b16 %v567, %v559
    %v736 = vpack.c.b16 %v568, %v560
    %v737 = vpack.c.b16 %v577, %v569
    %v738 = vpack.c.b16 %v578, %v570
    %v739 = vpack.c.b16 %v579, %v571
    %v740 = vpack.c.b16 %v580, %v572
    %v741 = vpack.c.b16 %v581, %v573
    %v742 = vpack.c.b16 %v582, %v574
    %v743 = vpack.c.b16 %v583, %v575
    %v744 = vpack.c.b16 %v584, %v576
    %v745 = vpack.c.b16 %v593, %v585
    %v746 = vpack.c.b16 %v594, %v586
    %v747 = vpack.c.b16 %v595, %v587
    %v748 = vpack.c.b16 %v596, %v588
    %v749 = vpack.c.b16 %v597, %v589
    %v750 = vpack.c.b16 %v598, %v590
    %v751 = vpack.c.b16 %v599, %v591
    %v752 = vpack.c.b16 %v600, %v592
    %v753 = vpack.c.b16 %v609, %v601
    %v754 = vpack.c.b16 %v610, %v602
    %v755 = vpack.c.b16 %v611, %v603
    %v756 = vpack.c.b16 %v612, %v604
    %v757 = vpack.c.b16 %v613, %v605
    %v758 = vpack.c.b16 %v614, %v606
    %v759 = vpack.c.b16 %v615, %v607
    %v760 = vpack.c.b16 %v616, %v608
    %v761 = vpack.c.b16 %v625, %v617
    %v762 = vpack.c.b16 %v626, %v618
    %v763 = vpack.c.b16 %v627, %v619
    %v764 = vpack.c.b16 %v628, %v620
    %v765 = vpack.c.b16 %v629, %v621
    %v766 = vpack.c.b16 %v630, %v622
    %v767 = vpack.c.b16 %v631, %v623
    %v768 = vpack.c.b16 %v632, %v624
    %v769 = vpack.c.b16 %v641, %v633
    %v770 = vpack.c.b16 %v642, %v634
    %v771 = vpack.c.b16 %v643, %v635
    %v772 = vpack.c.b16 %v644, %v636
    %v773 = vpack.c.b16 %v645, %v637
    %v774 = vpack.c.b16 %v646, %v638
    %v775 = vpack.c.b16 %v647, %v639
    %v776 = vpack.c.b16 %v648, %v640
    %905 = vmatpush.bf16.msra.mxu0 %v705
    %906 = vmatpush.bf16.msra.mxu0 %v697
    %907 = vmatpush.bf16.msra.mxu0 %v689
    %908 = vmatpush.bf16.msra.mxu0 %v681
    %909 = vmatpush.bf16.msra.mxu0 %v673
    %910 = vmatpush.bf16.msra.mxu0 %v665
    %911 = vmatpush.bf16.msra.mxu0 %v657
    %912 = vmatpush.bf16.msra.mxu0 %v649
    %913 = vmatmul.bf16.gmra.mxu0 %v117
    %v914 = vpop.f32.mrf.mxu0
    %v915 = vadd.f32 %v249, %v914
    %v916 = vpop.f32.mrf.mxu0
    %917 = vdwg.mxu0
    %918 = vmatpush.bf16.msra.mxu0 %v769
    %919 = vmatpush.bf16.msra.mxu0 %v761
    %920 = vmatpush.bf16.msra.mxu0 %v753
    %921 = vmatpush.bf16.msra.mxu0 %v745
    %922 = vmatpush.bf16.msra.mxu0 %v737
    %923 = vmatpush.bf16.msra.mxu0 %v729
    %924 = vmatpush.bf16.msra.mxu0 %v721
    %925 = vmatpush.bf16.msra.mxu0 %v713
    %926 = vmatmul.bf16.gmra.mxu0 %v118
    %v927 = vpop.f32.mrf.mxu0
    %v928 = vadd.f32 %v915, %v927
    %v929 = vpop.f32.mrf.mxu0
    %930 = vdwg.mxu0
    %931 = vmatpush.bf16.msra.mxu0 %v706
    %932 = vmatpush.bf16.msra.mxu0 %v698
    %933 = vmatpush.bf16.msra.mxu0 %v690
    %934 = vmatpush.bf16.msra.mxu0 %v682
    %935 = vmatpush.bf16.msra.mxu0 %v674
    %936 = vmatpush.bf16.msra.mxu0 %v666
    %937 = vmatpush.bf16.msra.mxu0 %v658
    %938 = vmatpush.bf16.msra.mxu0 %v650
    %939 = vmatmul.bf16.gmra.mxu0 %v117
    %v940 = vpop.f32.mrf.mxu0
    %v941 = vadd.f32 %v250, %v940
    %v942 = vpop.f32.mrf.mxu0
    %943 = vdwg.mxu0
    %944 = vmatpush.bf16.msra.mxu0 %v770
    %945 = vmatpush.bf16.msra.mxu0 %v762
    %946 = vmatpush.bf16.msra.mxu0 %v754
    %947 = vmatpush.bf16.msra.mxu0 %v746
    %948 = vmatpush.bf16.msra.mxu0 %v738
    %949 = vmatpush.bf16.msra.mxu0 %v730
    %950 = vmatpush.bf16.msra.mxu0 %v722
    %951 = vmatpush.bf16.msra.mxu0 %v714
    %952 = vmatmul.bf16.gmra.mxu0 %v118
    %v953 = vpop.f32.mrf.mxu0
    %v954 = vadd.f32 %v941, %v953
    %v955 = vpop.f32.mrf.mxu0
    %956 = vdwg.mxu0
    %957 = vmatpush.bf16.msra.mxu0 %v707
    %958 = vmatpush.bf16.msra.mxu0 %v699
    %959 = vmatpush.bf16.msra.mxu0 %v691
    %960 = vmatpush.bf16.msra.mxu0 %v683
    %961 = vmatpush.bf16.msra.mxu0 %v675
    %962 = vmatpush.bf16.msra.mxu0 %v667
    %963 = vmatpush.bf16.msra.mxu0 %v659
    %964 = vmatpush.bf16.msra.mxu0 %v651
    %965 = vmatmul.bf16.gmra.mxu0 %v117
    %v966 = vpop.f32.mrf.mxu0
    %v967 = vadd.f32 %v251, %v966
    %v968 = vpop.f32.mrf.mxu0
    %969 = vdwg.mxu0
    %970 = vmatpush.bf16.msra.mxu0 %v771
    %971 = vmatpush.bf16.msra.mxu0 %v763
    %972 = vmatpush.bf16.msra.mxu0 %v755
    %973 = vmatpush.bf16.msra.mxu0 %v747
    %974 = vmatpush.bf16.msra.mxu0 %v739
    %975 = vmatpush.bf16.msra.mxu0 %v731
    %976 = vmatpush.bf16.msra.mxu0 %v723
    %977 = vmatpush.bf16.msra.mxu0 %v715
    %978 = vmatmul.bf16.gmra.mxu0 %v118
    %v979 = vpop.f32.mrf.mxu0
    %v980 = vadd.f32 %v967, %v979
    %v981 = vpop.f32.mrf.mxu0
    %982 = vdwg.mxu0
    %983 = vmatpush.bf16.msra.mxu0 %v708
    %984 = vmatpush.bf16.msra.mxu0 %v700
    %985 = vmatpush.bf16.msra.mxu0 %v692
    %986 = vmatpush.bf16.msra.mxu0 %v684
    %987 = vmatpush.bf16.msra.mxu0 %v676
    %988 = vmatpush.bf16.msra.mxu0 %v668
    %989 = vmatpush.bf16.msra.mxu0 %v660
    %990 = vmatpush.bf16.msra.mxu0 %v652
    %991 = vmatmul.bf16.gmra.mxu0 %v117
    %v992 = vpop.f32.mrf.mxu0
    %v993 = vadd.f32 %v252, %v992
    %v994 = vpop.f32.mrf.mxu0
    %995 = vdwg.mxu0
    %996 = vmatpush.bf16.msra.mxu0 %v772
    %997 = vmatpush.bf16.msra.mxu0 %v764
    %998 = vmatpush.bf16.msra.mxu0 %v756
    %999 = vmatpush.bf16.msra.mxu0 %v748
    %1000 = vmatpush.bf16.msra.mxu0 %v740
    %1001 = vmatpush.bf16.msra.mxu0 %v732
    %1002 = vmatpush.bf16.msra.mxu0 %v724
    %1003 = vmatpush.bf16.msra.mxu0 %v716
    %1004 = vmatmul.bf16.gmra.mxu0 %v118
    %v1005 = vpop.f32.mrf.mxu0
    %v1006 = vadd.f32 %v993, %v1005
    %v1007 = vpop.f32.mrf.mxu0
    %1008 = vdwg.mxu0
    %1009 = vmatpush.bf16.msra.mxu0 %v709
    %1010 = vmatpush.bf16.msra.mxu0 %v701
    %1011 = vmatpush.bf16.msra.mxu0 %v693
    %1012 = vmatpush.bf16.msra.mxu0 %v685
    %1013 = vmatpush.bf16.msra.mxu0 %v677
    %1014 = vmatpush.bf16.msra.mxu0 %v669
    %1015 = vmatpush.bf16.msra.mxu0 %v661
    %1016 = vmatpush.bf16.msra.mxu0 %v653
    %1017 = vmatmul.bf16.gmra.mxu0 %v117
    %v1018 = vpop.f32.mrf.mxu0
    %v1019 = vadd.f32 %v253, %v1018
    %v1020 = vpop.f32.mrf.mxu0
    %1021 = vdwg.mxu0
    %1022 = vmatpush.bf16.msra.mxu0 %v773
    %1023 = vmatpush.bf16.msra.mxu0 %v765
    %1024 = vmatpush.bf16.msra.mxu0 %v757
    %1025 = vmatpush.bf16.msra.mxu0 %v749
    %1026 = vmatpush.bf16.msra.mxu0 %v741
    %1027 = vmatpush.bf16.msra.mxu0 %v733
    %1028 = vmatpush.bf16.msra.mxu0 %v725
    %1029 = vmatpush.bf16.msra.mxu0 %v717
    %1030 = vmatmul.bf16.gmra.mxu0 %v118
    %v1031 = vpop.f32.mrf.mxu0
    %v1032 = vadd.f32 %v1019, %v1031
    %v1033 = vpop.f32.mrf.mxu0
    %1034 = vdwg.mxu0
    %1035 = vmatpush.bf16.msra.mxu0 %v710
    %1036 = vmatpush.bf16.msra.mxu0 %v702
    %1037 = vmatpush.bf16.msra.mxu0 %v694
    %1038 = vmatpush.bf16.msra.mxu0 %v686
    %1039 = vmatpush.bf16.msra.mxu0 %v678
    %1040 = vmatpush.bf16.msra.mxu0 %v670
    %1041 = vmatpush.bf16.msra.mxu0 %v662
    %1042 = vmatpush.bf16.msra.mxu0 %v654
    %1043 = vmatmul.bf16.gmra.mxu0 %v117
    %v1044 = vpop.f32.mrf.mxu0
    %v1045 = vadd.f32 %v254, %v1044
    %v1046 = vpop.f32.mrf.mxu0
    %1047 = vdwg.mxu0
    %1048 = vmatpush.bf16.msra.mxu0 %v774
    %1049 = vmatpush.bf16.msra.mxu0 %v766
    %1050 = vmatpush.bf16.msra.mxu0 %v758
    %1051 = vmatpush.bf16.msra.mxu0 %v750
    %1052 = vmatpush.bf16.msra.mxu0 %v742
    %1053 = vmatpush.bf16.msra.mxu0 %v734
    %1054 = vmatpush.bf16.msra.mxu0 %v726
    %1055 = vmatpush.bf16.msra.mxu0 %v718
    %1056 = vmatmul.bf16.gmra.mxu0 %v118
    %v1057 = vpop.f32.mrf.mxu0
    %v1058 = vadd.f32 %v1045, %v1057
    %v1059 = vpop.f32.mrf.mxu0
    %1060 = vdwg.mxu0
    %1061 = vmatpush.bf16.msra.mxu0 %v711
    %1062 = vmatpush.bf16.msra.mxu0 %v703
    %1063 = vmatpush.bf16.msra.mxu0 %v695
    %1064 = vmatpush.bf16.msra.mxu0 %v687
    %1065 = vmatpush.bf16.msra.mxu0 %v679
    %1066 = vmatpush.bf16.msra.mxu0 %v671
    %1067 = vmatpush.bf16.msra.mxu0 %v663
    %1068 = vmatpush.bf16.msra.mxu0 %v655
    %1069 = vmatmul.bf16.gmra.mxu0 %v117
    %v1070 = vpop.f32.mrf.mxu0
    %v1071 = vadd.f32 %v255, %v1070
    %v1072 = vpop.f32.mrf.mxu0
    %1073 = vdwg.mxu0
    %1074 = vmatpush.bf16.msra.mxu0 %v775
    %1075 = vmatpush.bf16.msra.mxu0 %v767
    %1076 = vmatpush.bf16.msra.mxu0 %v759
    %1077 = vmatpush.bf16.msra.mxu0 %v751
    %1078 = vmatpush.bf16.msra.mxu0 %v743
    %1079 = vmatpush.bf16.msra.mxu0 %v735
    %1080 = vmatpush.bf16.msra.mxu0 %v727
    %1081 = vmatpush.bf16.msra.mxu0 %v719
    %1082 = vmatmul.bf16.gmra.mxu0 %v118
    %v1083 = vpop.f32.mrf.mxu0
    %v1084 = vadd.f32 %v1071, %v1083
    %v1085 = vpop.f32.mrf.mxu0
    %1086 = vdwg.mxu0
    %1087 = vmatpush.bf16.msra.mxu0 %v712
    %1088 = vmatpush.bf16.msra.mxu0 %v704
    %1089 = vmatpush.bf16.msra.mxu0 %v696
    %1090 = vmatpush.bf16.msra.mxu0 %v688
    %1091 = vmatpush.bf16.msra.mxu0 %v680
    %1092 = vmatpush.bf16.msra.mxu0 %v672
    %1093 = vmatpush.bf16.msra.mxu0 %v664
    %1094 = vmatpush.bf16.msra.mxu0 %v656
    %1095 = vmatmul.bf16.gmra.mxu0 %v117
    %v1096 = vpop.f32.mrf.mxu0
    %v1097 = vadd.f32 %v256, %v1096
    %v1098 = vpop.f32.mrf.mxu0
    %1099 = vdwg.mxu0
    %1100 = vmatpush.bf16.msra.mxu0 %v776
    %1101 = vmatpush.bf16.msra.mxu0 %v768
    %1102 = vmatpush.bf16.msra.mxu0 %v760
    %1103 = vmatpush.bf16.msra.mxu0 %v752
    %1104 = vmatpush.bf16.msra.mxu0 %v744
    %1105 = vmatpush.bf16.msra.mxu0 %v736
    %1106 = vmatpush.bf16.msra.mxu0 %v728
    %1107 = vmatpush.bf16.msra.mxu0 %v720
    %1108 = vmatmul.bf16.gmra.mxu0 %v118
    %v1109 = vpop.f32.mrf.mxu0
    %v1110 = vadd.f32 %v1097, %v1109
    %v1111 = vpop.f32.mrf.mxu0
    %1112 = vdwg.mxu0
    %v1113 = vpack.c.bf16 %v954, %v928
    %v1114 = vpack.c.bf16 %v1006, %v980
    %v1115 = vpack.c.bf16 %v1058, %v1032
    %v1116 = vpack.c.bf16 %v1110, %v1084
    %v1117 = vunpack.c.l.bf16 %v1113
    %v1118 = vunpack.c.h.bf16 %v1113
    %v1119 = vunpack.c.l.bf16 %v1114
    %v1120 = vunpack.c.h.bf16 %v1114
    %v1121 = vunpack.c.l.bf16 %v1115
    %v1122 = vunpack.c.h.bf16 %v1115
    %v1123 = vunpack.c.l.bf16 %v1116
    %v1124 = vunpack.c.h.bf16 %v1116
    %v1125 = vmax.f32 %v1117, 0.0
    %v1126 = vmax.f32 %v1118, 0.0
    %v1127 = vmax.f32 %v1119, 0.0
    %v1128 = vmax.f32 %v1120, 0.0
    %v1129 = vmax.f32 %v1121, 0.0
    %v1130 = vmax.f32 %v1122, 0.0
    %v1131 = vmax.f32 %v1123, 0.0
    %v1132 = vmax.f32 %v1124, 0.0
    %v1133 = vpack.c.bf16 %v1125, %v1125
    %v1134 = vpack.c.bf16 %v1126, %v1126
    %v1135 = vpack.c.bf16 %v1127, %v1127
    %v1136 = vpack.c.bf16 %v1128, %v1128
    %v1137 = vpack.c.bf16 %v1129, %v1129
    %v1138 = vpack.c.bf16 %v1130, %v1130
    %v1139 = vpack.c.bf16 %v1131, %v1131
    %v1140 = vpack.c.bf16 %v1132, %v1132
    %v1141 = vld [vmem:[#allocation8] sm:$0xff]
    %v1142 = vld [vmem:[#allocation8 + $0x8] sm:$0xff]
    %v1143 = vld [vmem:[#allocation8 + $0x10] sm:$0xff]
    %v1144 = vld [vmem:[#allocation8 + $0x18] sm:$0xff]
    %v1145 = vld [vmem:[#allocation8 + $0x20] sm:$0xff]
    %v1146 = vld [vmem:[#allocation8 + $0x28] sm:$0xff]
    %v1147 = vld [vmem:[#allocation8 + $0x30] sm:$0xff]
    %v1148 = vld [vmem:[#allocation8 + $0x38] sm:$0xff]
    %v1149 = vld [vmem:[#allocation8 + $0x40] sm:$0xff]
    %v1150 = vld [vmem:[#allocation8 + $0x48] sm:$0xff]
    %v1151 = vld [vmem:[#allocation8 + $0x50] sm:$0xff]
    %v1152 = vld [vmem:[#allocation8 + $0x58] sm:$0xff]
    %v1153 = vld [vmem:[#allocation8 + $0x60] sm:$0xff]
    %v1154 = vld [vmem:[#allocation8 + $0x68] sm:$0xff]
    %v1155 = vld [vmem:[#allocation8 + $0x70] sm:$0xff]
    %v1156 = vld [vmem:[#allocation8 + $0x78] sm:$0xff]
    %v1157 = vld [vmem:[#allocation8 + $0x80] sm:$0xff]
    %v1158 = vld [vmem:[#allocation8 + $0x88] sm:$0xff]
    %v1159 = vld [vmem:[#allocation8 + $0x90] sm:$0xff]
    %v1160 = vld [vmem:[#allocation8 + $0x98] sm:$0xff]
    %v1161 = vld [vmem:[#allocation8 + $0xa0] sm:$0xff]
    %v1162 = vld [vmem:[#allocation8 + $0xa8] sm:$0xff]
    %v1163 = vld [vmem:[#allocation8 + $0xb0] sm:$0xff]
    %v1164 = vld [vmem:[#allocation8 + $0xb8] sm:$0xff]
    %v1165 = vld [vmem:[#allocation8 + $0xc0] sm:$0xff]
    %v1166 = vld [vmem:[#allocation8 + $0xc8] sm:$0xff]
    %v1167 = vld [vmem:[#allocation8 + $0xd0] sm:$0xff]
    %v1168 = vld [vmem:[#allocation8 + $0xd8] sm:$0xff]
    %v1169 = vld [vmem:[#allocation8 + $0xe0] sm:$0xff]
    %v1170 = vld [vmem:[#allocation8 + $0xe8] sm:$0xff]
    %v1171 = vld [vmem:[#allocation8 + $0xf0] sm:$0xff]
    %v1172 = vld [vmem:[#allocation8 + $0xf8] sm:$0xff]
    %v1173 = vld [vmem:[#allocation8 + $0x100] sm:$0xff]
    %v1174 = vld [vmem:[#allocation8 + $0x108] sm:$0xff]
    %v1175 = vld [vmem:[#allocation8 + $0x110] sm:$0xff]
    %v1176 = vld [vmem:[#allocation8 + $0x118] sm:$0xff]
    %v1177 = vld [vmem:[#allocation8 + $0x120] sm:$0xff]
    %v1178 = vld [vmem:[#allocation8 + $0x128] sm:$0xff]
    %v1179 = vld [vmem:[#allocation8 + $0x130] sm:$0xff]
    %v1180 = vld [vmem:[#allocation8 + $0x138] sm:$0xff]
    %v1181 = vld [vmem:[#allocation8 + $0x140] sm:$0xff]
    %v1182 = vld [vmem:[#allocation8 + $0x148] sm:$0xff]
    %v1183 = vld [vmem:[#allocation8 + $0x150] sm:$0xff]
    %v1184 = vld [vmem:[#allocation8 + $0x158] sm:$0xff]
    %v1185 = vld [vmem:[#allocation8 + $0x160] sm:$0xff]
    %v1186 = vld [vmem:[#allocation8 + $0x168] sm:$0xff]
    %v1187 = vld [vmem:[#allocation8 + $0x170] sm:$0xff]
    %v1188 = vld [vmem:[#allocation8 + $0x178] sm:$0xff]
    %v1189 = vld [vmem:[#allocation8 + $0x180] sm:$0xff]
    %v1190 = vld [vmem:[#allocation8 + $0x188] sm:$0xff]
    %v1191 = vld [vmem:[#allocation8 + $0x190] sm:$0xff]
    %v1192 = vld [vmem:[#allocation8 + $0x198] sm:$0xff]
    %v1193 = vld [vmem:[#allocation8 + $0x1a0] sm:$0xff]
    %v1194 = vld [vmem:[#allocation8 + $0x1a8] sm:$0xff]
    %v1195 = vld [vmem:[#allocation8 + $0x1b0] sm:$0xff]
    %v1196 = vld [vmem:[#allocation8 + $0x1b8] sm:$0xff]
    %v1197 = vld [vmem:[#allocation8 + $0x1c0] sm:$0xff]
    %v1198 = vld [vmem:[#allocation8 + $0x1c8] sm:$0xff]
    %v1199 = vld [vmem:[#allocation8 + $0x1d0] sm:$0xff]
    %v1200 = vld [vmem:[#allocation8 + $0x1d8] sm:$0xff]
    %v1201 = vld [vmem:[#allocation8 + $0x1e0] sm:$0xff]
    %v1202 = vld [vmem:[#allocation8 + $0x1e8] sm:$0xff]
    %v1203 = vld [vmem:[#allocation8 + $0x1f0] sm:$0xff]
    %v1204 = vld [vmem:[#allocation8 + $0x1f8] sm:$0xff]
    %v1205 = vld [vmem:[#allocation8 + $0x200] sm:$0xff]
    %v1206 = vld [vmem:[#allocation8 + $0x208] sm:$0xff]
    %v1207 = vld [vmem:[#allocation8 + $0x210] sm:$0xff]
    %v1208 = vld [vmem:[#allocation8 + $0x218] sm:$0xff]
    %v1209 = vld [vmem:[#allocation8 + $0x220] sm:$0xff]
    %v1210 = vld [vmem:[#allocation8 + $0x228] sm:$0xff]
    %v1211 = vld [vmem:[#allocation8 + $0x230] sm:$0xff]
    %v1212 = vld [vmem:[#allocation8 + $0x238] sm:$0xff]
    %v1213 = vld [vmem:[#allocation8 + $0x240] sm:$0xff]
    %v1214 = vld [vmem:[#allocation8 + $0x248] sm:$0xff]
    %v1215 = vld [vmem:[#allocation8 + $0x250] sm:$0xff]
    %v1216 = vld [vmem:[#allocation8 + $0x258] sm:$0xff]
    %v1217 = vld [vmem:[#allocation8 + $0x260] sm:$0xff]
    %v1218 = vld [vmem:[#allocation8 + $0x268] sm:$0xff]
    %v1219 = vld [vmem:[#allocation8 + $0x270] sm:$0xff]
    %v1220 = vld [vmem:[#allocation8 + $0x278] sm:$0xff]
    %v1221 = vld [vmem:[#allocation8 + $0x280] sm:$0xff]
    %v1222 = vld [vmem:[#allocation8 + $0x288] sm:$0xff]
    %v1223 = vld [vmem:[#allocation8 + $0x290] sm:$0xff]
    %v1224 = vld [vmem:[#allocation8 + $0x298] sm:$0xff]
    %v1225 = vld [vmem:[#allocation8 + $0x2a0] sm:$0xff]
    %v1226 = vld [vmem:[#allocation8 + $0x2a8] sm:$0xff]
    %v1227 = vld [vmem:[#allocation8 + $0x2b0] sm:$0xff]
    %v1228 = vld [vmem:[#allocation8 + $0x2b8] sm:$0xff]
    %v1229 = vld [vmem:[#allocation8 + $0x2c0] sm:$0xff]
    %v1230 = vld [vmem:[#allocation8 + $0x2c8] sm:$0xff]
    %v1231 = vld [vmem:[#allocation8 + $0x2d0] sm:$0xff]
    %v1232 = vld [vmem:[#allocation8 + $0x2d8] sm:$0xff]
    %v1233 = vld [vmem:[#allocation8 + $0x2e0] sm:$0xff]
    %v1234 = vld [vmem:[#allocation8 + $0x2e8] sm:$0xff]
    %v1235 = vld [vmem:[#allocation8 + $0x2f0] sm:$0xff]
    %v1236 = vld [vmem:[#allocation8 + $0x2f8] sm:$0xff]
    %v1237 = vld [vmem:[#allocation8 + $0x300] sm:$0xff]
    %v1238 = vld [vmem:[#allocation8 + $0x308] sm:$0xff]
    %v1239 = vld [vmem:[#allocation8 + $0x310] sm:$0xff]
    %v1240 = vld [vmem:[#allocation8 + $0x318] sm:$0xff]
    %v1241 = vld [vmem:[#allocation8 + $0x320] sm:$0xff]
    %v1242 = vld [vmem:[#allocation8 + $0x328] sm:$0xff]
    %v1243 = vld [vmem:[#allocation8 + $0x330] sm:$0xff]
    %v1244 = vld [vmem:[#allocation8 + $0x338] sm:$0xff]
    %v1245 = vld [vmem:[#allocation8 + $0x340] sm:$0xff]
    %v1246 = vld [vmem:[#allocation8 + $0x348] sm:$0xff]
    %v1247 = vld [vmem:[#allocation8 + $0x350] sm:$0xff]
    %v1248 = vld [vmem:[#allocation8 + $0x358] sm:$0xff]
    %v1249 = vld [vmem:[#allocation8 + $0x360] sm:$0xff]
    %v1250 = vld [vmem:[#allocation8 + $0x368] sm:$0xff]
    %v1251 = vld [vmem:[#allocation8 + $0x370] sm:$0xff]
    %v1252 = vld [vmem:[#allocation8 + $0x378] sm:$0xff]
    %v1253 = vld [vmem:[#allocation8 + $0x380] sm:$0xff]
    %v1254 = vld [vmem:[#allocation8 + $0x388] sm:$0xff]
    %v1255 = vld [vmem:[#allocation8 + $0x390] sm:$0xff]
    %v1256 = vld [vmem:[#allocation8 + $0x398] sm:$0xff]
    %v1257 = vld [vmem:[#allocation8 + $0x3a0] sm:$0xff]
    %v1258 = vld [vmem:[#allocation8 + $0x3a8] sm:$0xff]
    %v1259 = vld [vmem:[#allocation8 + $0x3b0] sm:$0xff]
    %v1260 = vld [vmem:[#allocation8 + $0x3b8] sm:$0xff]
    %v1261 = vld [vmem:[#allocation8 + $0x3c0] sm:$0xff]
    %v1262 = vld [vmem:[#allocation8 + $0x3c8] sm:$0xff]
    %v1263 = vld [vmem:[#allocation8 + $0x3d0] sm:$0xff]
    %v1264 = vld [vmem:[#allocation8 + $0x3d8] sm:$0xff]
    %v1265 = vld [vmem:[#allocation8 + $0x3e0] sm:$0xff]
    %v1266 = vld [vmem:[#allocation8 + $0x3e8] sm:$0xff]
    %v1267 = vld [vmem:[#allocation8 + $0x3f0] sm:$0xff]
    %v1268 = vld [vmem:[#allocation8 + $0x3f8] sm:$0xff]
    %v1269 = vld [vmem:[#allocation8 + $0x400] sm:$0xff]
    %v1270 = vld [vmem:[#allocation8 + $0x408] sm:$0xff]
    %v1271 = vld [vmem:[#allocation8 + $0x410] sm:$0xff]
    %v1272 = vld [vmem:[#allocation8 + $0x418] sm:$0xff]
    %v1273 = vld [vmem:[#allocation8 + $0x420] sm:$0xff]
    %v1274 = vld [vmem:[#allocation8 + $0x428] sm:$0xff]
    %v1275 = vld [vmem:[#allocation8 + $0x430] sm:$0xff]
    %v1276 = vld [vmem:[#allocation8 + $0x438] sm:$0xff]
    %v1277 = vld [vmem:[#allocation8 + $0x440] sm:$0xff]
    %v1278 = vld [vmem:[#allocation8 + $0x448] sm:$0xff]
    %v1279 = vld [vmem:[#allocation8 + $0x450] sm:$0xff]
    %v1280 = vld [vmem:[#allocation8 + $0x458] sm:$0xff]
    %v1281 = vld [vmem:[#allocation8 + $0x460] sm:$0xff]
    %v1282 = vld [vmem:[#allocation8 + $0x468] sm:$0xff]
    %v1283 = vld [vmem:[#allocation8 + $0x470] sm:$0xff]
    %v1284 = vld [vmem:[#allocation8 + $0x478] sm:$0xff]
    %v1285 = vld [vmem:[#allocation8 + $0x480] sm:$0xff]
    %v1286 = vld [vmem:[#allocation8 + $0x488] sm:$0xff]
    %v1287 = vld [vmem:[#allocation8 + $0x490] sm:$0xff]
    %v1288 = vld [vmem:[#allocation8 + $0x498] sm:$0xff]
    %v1289 = vld [vmem:[#allocation8 + $0x4a0] sm:$0xff]
    %v1290 = vld [vmem:[#allocation8 + $0x4a8] sm:$0xff]
    %v1291 = vld [vmem:[#allocation8 + $0x4b0] sm:$0xff]
    %v1292 = vld [vmem:[#allocation8 + $0x4b8] sm:$0xff]
    %v1293 = vld [vmem:[#allocation8 + $0x4c0] sm:$0xff]
    %v1294 = vld [vmem:[#allocation8 + $0x4c8] sm:$0xff]
    %v1295 = vld [vmem:[#allocation8 + $0x4d0] sm:$0xff]
    %v1296 = vld [vmem:[#allocation8 + $0x4d8] sm:$0xff]
    %v1297 = vld [vmem:[#allocation8 + $0x4e0] sm:$0xff]
    %v1298 = vld [vmem:[#allocation8 + $0x4e8] sm:$0xff]
    %v1299 = vld [vmem:[#allocation8 + $0x4f0] sm:$0xff]
    %v1300 = vld [vmem:[#allocation8 + $0x4f8] sm:$0xff]
    %v1301 = vld [vmem:[#allocation8 + $0x500] sm:$0xff]
    %v1302 = vld [vmem:[#allocation8 + $0x508] sm:$0xff]
    %v1303 = vld [vmem:[#allocation8 + $0x510] sm:$0xff]
    %v1304 = vld [vmem:[#allocation8 + $0x518] sm:$0xff]
    %v1305 = vld [vmem:[#allocation8 + $0x520] sm:$0xff]
    %v1306 = vld [vmem:[#allocation8 + $0x528] sm:$0xff]
    %v1307 = vld [vmem:[#allocation8 + $0x530] sm:$0xff]
    %v1308 = vld [vmem:[#allocation8 + $0x538] sm:$0xff]
    %v1309 = vld [vmem:[#allocation8 + $0x540] sm:$0xff]
    %v1310 = vld [vmem:[#allocation8 + $0x548] sm:$0xff]
    %v1311 = vld [vmem:[#allocation8 + $0x550] sm:$0xff]
    %v1312 = vld [vmem:[#allocation8 + $0x558] sm:$0xff]
    %v1313 = vld [vmem:[#allocation8 + $0x560] sm:$0xff]
    %v1314 = vld [vmem:[#allocation8 + $0x568] sm:$0xff]
    %v1315 = vld [vmem:[#allocation8 + $0x570] sm:$0xff]
    %v1316 = vld [vmem:[#allocation8 + $0x578] sm:$0xff]
    %v1317 = vld [vmem:[#allocation8 + $0x580] sm:$0xff]
    %v1318 = vld [vmem:[#allocation8 + $0x588] sm:$0xff]
    %v1319 = vld [vmem:[#allocation8 + $0x590] sm:$0xff]
    %v1320 = vld [vmem:[#allocation8 + $0x598] sm:$0xff]
    %v1321 = vld [vmem:[#allocation8 + $0x5a0] sm:$0xff]
    %v1322 = vld [vmem:[#allocation8 + $0x5a8] sm:$0xff]
    %v1323 = vld [vmem:[#allocation8 + $0x5b0] sm:$0xff]
    %v1324 = vld [vmem:[#allocation8 + $0x5b8] sm:$0xff]
    %v1325 = vld [vmem:[#allocation8 + $0x5c0] sm:$0xff]
    %v1326 = vld [vmem:[#allocation8 + $0x5c8] sm:$0xff]
    %v1327 = vld [vmem:[#allocation8 + $0x5d0] sm:$0xff]
    %v1328 = vld [vmem:[#allocation8 + $0x5d8] sm:$0xff]
    %v1329 = vld [vmem:[#allocation8 + $0x5e0] sm:$0xff]
    %v1330 = vld [vmem:[#allocation8 + $0x5e8] sm:$0xff]
    %v1331 = vld [vmem:[#allocation8 + $0x5f0] sm:$0xff]
    %v1332 = vld [vmem:[#allocation8 + $0x5f8] sm:$0xff]
    %v1333 = vld [vmem:[#allocation8 + $0x600] sm:$0xff]
    %v1334 = vld [vmem:[#allocation8 + $0x608] sm:$0xff]
    %v1335 = vld [vmem:[#allocation8 + $0x610] sm:$0xff]
    %v1336 = vld [vmem:[#allocation8 + $0x618] sm:$0xff]
    %v1337 = vld [vmem:[#allocation8 + $0x620] sm:$0xff]
    %v1338 = vld [vmem:[#allocation8 + $0x628] sm:$0xff]
    %v1339 = vld [vmem:[#allocation8 + $0x630] sm:$0xff]
    %v1340 = vld [vmem:[#allocation8 + $0x638] sm:$0xff]
    %v1341 = vld [vmem:[#allocation8 + $0x640] sm:$0xff]
    %v1342 = vld [vmem:[#allocation8 + $0x648] sm:$0xff]
    %v1343 = vld [vmem:[#allocation8 + $0x650] sm:$0xff]
    %v1344 = vld [vmem:[#allocation8 + $0x658] sm:$0xff]
    %v1345 = vld [vmem:[#allocation8 + $0x660] sm:$0xff]
    %v1346 = vld [vmem:[#allocation8 + $0x668] sm:$0xff]
    %v1347 = vld [vmem:[#allocation8 + $0x670] sm:$0xff]
    %v1348 = vld [vmem:[#allocation8 + $0x678] sm:$0xff]
    %v1349 = vld [vmem:[#allocation8 + $0x680] sm:$0xff]
    %v1350 = vld [vmem:[#allocation8 + $0x688] sm:$0xff]
    %v1351 = vld [vmem:[#allocation8 + $0x690] sm:$0xff]
    %v1352 = vld [vmem:[#allocation8 + $0x698] sm:$0xff]
    %v1353 = vld [vmem:[#allocation8 + $0x6a0] sm:$0xff]
    %v1354 = vld [vmem:[#allocation8 + $0x6a8] sm:$0xff]
    %v1355 = vld [vmem:[#allocation8 + $0x6b0] sm:$0xff]
    %v1356 = vld [vmem:[#allocation8 + $0x6b8] sm:$0xff]
    %v1357 = vld [vmem:[#allocation8 + $0x6c0] sm:$0xff]
    %v1358 = vld [vmem:[#allocation8 + $0x6c8] sm:$0xff]
    %v1359 = vld [vmem:[#allocation8 + $0x6d0] sm:$0xff]
    %v1360 = vld [vmem:[#allocation8 + $0x6d8] sm:$0xff]
    %v1361 = vld [vmem:[#allocation8 + $0x6e0] sm:$0xff]
    %v1362 = vld [vmem:[#allocation8 + $0x6e8] sm:$0xff]
    %v1363 = vld [vmem:[#allocation8 + $0x6f0] sm:$0xff]
    %v1364 = vld [vmem:[#allocation8 + $0x6f8] sm:$0xff]
    %v1365 = vld [vmem:[#allocation8 + $0x700] sm:$0xff]
    %v1366 = vld [vmem:[#allocation8 + $0x708] sm:$0xff]
    %v1367 = vld [vmem:[#allocation8 + $0x710] sm:$0xff]
    %v1368 = vld [vmem:[#allocation8 + $0x718] sm:$0xff]
    %v1369 = vld [vmem:[#allocation8 + $0x720] sm:$0xff]
    %v1370 = vld [vmem:[#allocation8 + $0x728] sm:$0xff]
    %v1371 = vld [vmem:[#allocation8 + $0x730] sm:$0xff]
    %v1372 = vld [vmem:[#allocation8 + $0x738] sm:$0xff]
    %v1373 = vld [vmem:[#allocation8 + $0x740] sm:$0xff]
    %v1374 = vld [vmem:[#allocation8 + $0x748] sm:$0xff]
    %v1375 = vld [vmem:[#allocation8 + $0x750] sm:$0xff]
    %v1376 = vld [vmem:[#allocation8 + $0x758] sm:$0xff]
    %v1377 = vld [vmem:[#allocation8 + $0x760] sm:$0xff]
    %v1378 = vld [vmem:[#allocation8 + $0x768] sm:$0xff]
    %v1379 = vld [vmem:[#allocation8 + $0x770] sm:$0xff]
    %v1380 = vld [vmem:[#allocation8 + $0x778] sm:$0xff]
    %v1381 = vld [vmem:[#allocation8 + $0x780] sm:$0xff]
    %v1382 = vld [vmem:[#allocation8 + $0x788] sm:$0xff]
    %v1383 = vld [vmem:[#allocation8 + $0x790] sm:$0xff]
    %v1384 = vld [vmem:[#allocation8 + $0x798] sm:$0xff]
    %v1385 = vld [vmem:[#allocation8 + $0x7a0] sm:$0xff]
    %v1386 = vld [vmem:[#allocation8 + $0x7a8] sm:$0xff]
    %v1387 = vld [vmem:[#allocation8 + $0x7b0] sm:$0xff]
    %v1388 = vld [vmem:[#allocation8 + $0x7b8] sm:$0xff]
    %v1389 = vld [vmem:[#allocation8 + $0x7c0] sm:$0xff]
    %v1390 = vld [vmem:[#allocation8 + $0x7c8] sm:$0xff]
    %v1391 = vld [vmem:[#allocation8 + $0x7d0] sm:$0xff]
    %v1392 = vld [vmem:[#allocation8 + $0x7d8] sm:$0xff]
    %v1393 = vld [vmem:[#allocation8 + $0x7e0] sm:$0xff]
    %v1394 = vld [vmem:[#allocation8 + $0x7e8] sm:$0xff]
    %v1395 = vld [vmem:[#allocation8 + $0x7f0] sm:$0xff]
    %v1396 = vld [vmem:[#allocation8 + $0x7f8] sm:$0xff]
    %v1397 = vld [vmem:[#allocation10] sm:$0xf]
    %v1399 = vperm.slane %v1397, 0
    %v1400 = vperm.slane %v1397, 1
    %v1401 = vperm.slane %v1397, 2
    %v1402 = vperm.slane %v1397, 3
    %v1663 = vunpack.c.l.b16 %v1141
    %v1664 = vunpack.c.h.b16 %v1141
    %v1665 = vunpack.c.l.b16 %v1142
    %v1666 = vunpack.c.h.b16 %v1142
    %v1667 = vunpack.c.l.b16 %v1143
    %v1668 = vunpack.c.h.b16 %v1143
    %v1669 = vunpack.c.l.b16 %v1144
    %v1670 = vunpack.c.h.b16 %v1144
    %v1671 = vunpack.c.l.b16 %v1145
    %v1672 = vunpack.c.h.b16 %v1145
    %v1673 = vunpack.c.l.b16 %v1146
    %v1674 = vunpack.c.h.b16 %v1146
    %v1675 = vunpack.c.l.b16 %v1147
    %v1676 = vunpack.c.h.b16 %v1147
    %v1677 = vunpack.c.l.b16 %v1148
    %v1678 = vunpack.c.h.b16 %v1148
    %v1679 = vunpack.c.l.b16 %v1149
    %v1680 = vunpack.c.h.b16 %v1149
    %v1681 = vunpack.c.l.b16 %v1150
    %v1682 = vunpack.c.h.b16 %v1150
    %v1683 = vunpack.c.l.b16 %v1151
    %v1684 = vunpack.c.h.b16 %v1151
    %v1685 = vunpack.c.l.b16 %v1152
    %v1686 = vunpack.c.h.b16 %v1152
    %v1687 = vunpack.c.l.b16 %v1153
    %v1688 = vunpack.c.h.b16 %v1153
    %v1689 = vunpack.c.l.b16 %v1154
    %v1690 = vunpack.c.h.b16 %v1154
    %v1691 = vunpack.c.l.b16 %v1155
    %v1692 = vunpack.c.h.b16 %v1155
    %v1693 = vunpack.c.l.b16 %v1156
    %v1694 = vunpack.c.h.b16 %v1156
    %v1695 = vunpack.c.l.b16 %v1157
    %v1696 = vunpack.c.h.b16 %v1157
    %v1697 = vunpack.c.l.b16 %v1158
    %v1698 = vunpack.c.h.b16 %v1158
    %v1699 = vunpack.c.l.b16 %v1159
    %v1700 = vunpack.c.h.b16 %v1159
    %v1701 = vunpack.c.l.b16 %v1160
    %v1702 = vunpack.c.h.b16 %v1160
    %v1703 = vunpack.c.l.b16 %v1161
    %v1704 = vunpack.c.h.b16 %v1161
    %v1705 = vunpack.c.l.b16 %v1162
    %v1706 = vunpack.c.h.b16 %v1162
    %v1707 = vunpack.c.l.b16 %v1163
    %v1708 = vunpack.c.h.b16 %v1163
    %v1709 = vunpack.c.l.b16 %v1164
    %v1710 = vunpack.c.h.b16 %v1164
    %v1711 = vunpack.c.l.b16 %v1165
    %v1712 = vunpack.c.h.b16 %v1165
    %v1713 = vunpack.c.l.b16 %v1166
    %v1714 = vunpack.c.h.b16 %v1166
    %v1715 = vunpack.c.l.b16 %v1167
    %v1716 = vunpack.c.h.b16 %v1167
    %v1717 = vunpack.c.l.b16 %v1168
    %v1718 = vunpack.c.h.b16 %v1168
    %v1719 = vunpack.c.l.b16 %v1169
    %v1720 = vunpack.c.h.b16 %v1169
    %v1721 = vunpack.c.l.b16 %v1170
    %v1722 = vunpack.c.h.b16 %v1170
    %v1723 = vunpack.c.l.b16 %v1171
    %v1724 = vunpack.c.h.b16 %v1171
    %v1725 = vunpack.c.l.b16 %v1172
    %v1726 = vunpack.c.h.b16 %v1172
    %v1727 = vunpack.c.l.b16 %v1173
    %v1728 = vunpack.c.h.b16 %v1173
    %v1729 = vunpack.c.l.b16 %v1174
    %v1730 = vunpack.c.h.b16 %v1174
    %v1731 = vunpack.c.l.b16 %v1175
    %v1732 = vunpack.c.h.b16 %v1175
    %v1733 = vunpack.c.l.b16 %v1176
    %v1734 = vunpack.c.h.b16 %v1176
    %v1735 = vunpack.c.l.b16 %v1177
    %v1736 = vunpack.c.h.b16 %v1177
    %v1737 = vunpack.c.l.b16 %v1178
    %v1738 = vunpack.c.h.b16 %v1178
    %v1739 = vunpack.c.l.b16 %v1179
    %v1740 = vunpack.c.h.b16 %v1179
    %v1741 = vunpack.c.l.b16 %v1180
    %v1742 = vunpack.c.h.b16 %v1180
    %v1743 = vunpack.c.l.b16 %v1181
    %v1744 = vunpack.c.h.b16 %v1181
    %v1745 = vunpack.c.l.b16 %v1182
    %v1746 = vunpack.c.h.b16 %v1182
    %v1747 = vunpack.c.l.b16 %v1183
    %v1748 = vunpack.c.h.b16 %v1183
    %v1749 = vunpack.c.l.b16 %v1184
    %v1750 = vunpack.c.h.b16 %v1184
    %v1751 = vunpack.c.l.b16 %v1185
    %v1752 = vunpack.c.h.b16 %v1185
    %v1753 = vunpack.c.l.b16 %v1186
    %v1754 = vunpack.c.h.b16 %v1186
    %v1755 = vunpack.c.l.b16 %v1187
    %v1756 = vunpack.c.h.b16 %v1187
    %v1757 = vunpack.c.l.b16 %v1188
    %v1758 = vunpack.c.h.b16 %v1188
    %v1759 = vunpack.c.l.b16 %v1189
    %v1760 = vunpack.c.h.b16 %v1189
    %v1761 = vunpack.c.l.b16 %v1190
    %v1762 = vunpack.c.h.b16 %v1190
    %v1763 = vunpack.c.l.b16 %v1191
    %v1764 = vunpack.c.h.b16 %v1191
    %v1765 = vunpack.c.l.b16 %v1192
    %v1766 = vunpack.c.h.b16 %v1192
    %v1767 = vunpack.c.l.b16 %v1193
    %v1768 = vunpack.c.h.b16 %v1193
    %v1769 = vunpack.c.l.b16 %v1194
    %v1770 = vunpack.c.h.b16 %v1194
    %v1771 = vunpack.c.l.b16 %v1195
    %v1772 = vunpack.c.h.b16 %v1195
    %v1773 = vunpack.c.l.b16 %v1196
    %v1774 = vunpack.c.h.b16 %v1196
    %v1775 = vunpack.c.l.b16 %v1197
    %v1776 = vunpack.c.h.b16 %v1197
    %v1777 = vunpack.c.l.b16 %v1198
    %v1778 = vunpack.c.h.b16 %v1198
    %v1779 = vunpack.c.l.b16 %v1199
    %v1780 = vunpack.c.h.b16 %v1199
    %v1781 = vunpack.c.l.b16 %v1200
    %v1782 = vunpack.c.h.b16 %v1200
    %v1783 = vunpack.c.l.b16 %v1201
    %v1784 = vunpack.c.h.b16 %v1201
    %v1785 = vunpack.c.l.b16 %v1202
    %v1786 = vunpack.c.h.b16 %v1202
    %v1787 = vunpack.c.l.b16 %v1203
    %v1788 = vunpack.c.h.b16 %v1203
    %v1789 = vunpack.c.l.b16 %v1204
    %v1790 = vunpack.c.h.b16 %v1204
    %v1791 = vunpack.c.l.b16 %v1205
    %v1792 = vunpack.c.h.b16 %v1205
    %v1793 = vunpack.c.l.b16 %v1206
    %v1794 = vunpack.c.h.b16 %v1206
    %v1795 = vunpack.c.l.b16 %v1207
    %v1796 = vunpack.c.h.b16 %v1207
    %v1797 = vunpack.c.l.b16 %v1208
    %v1798 = vunpack.c.h.b16 %v1208
    %v1799 = vunpack.c.l.b16 %v1209
    %v1800 = vunpack.c.h.b16 %v1209
    %v1801 = vunpack.c.l.b16 %v1210
    %v1802 = vunpack.c.h.b16 %v1210
    %v1803 = vunpack.c.l.b16 %v1211
    %v1804 = vunpack.c.h.b16 %v1211
    %v1805 = vunpack.c.l.b16 %v1212
    %v1806 = vunpack.c.h.b16 %v1212
    %v1807 = vunpack.c.l.b16 %v1213
    %v1808 = vunpack.c.h.b16 %v1213
    %v1809 = vunpack.c.l.b16 %v1214
    %v1810 = vunpack.c.h.b16 %v1214
    %v1811 = vunpack.c.l.b16 %v1215
    %v1812 = vunpack.c.h.b16 %v1215
    %v1813 = vunpack.c.l.b16 %v1216
    %v1814 = vunpack.c.h.b16 %v1216
    %v1815 = vunpack.c.l.b16 %v1217
    %v1816 = vunpack.c.h.b16 %v1217
    %v1817 = vunpack.c.l.b16 %v1218
    %v1818 = vunpack.c.h.b16 %v1218
    %v1819 = vunpack.c.l.b16 %v1219
    %v1820 = vunpack.c.h.b16 %v1219
    %v1821 = vunpack.c.l.b16 %v1220
    %v1822 = vunpack.c.h.b16 %v1220
    %v1823 = vunpack.c.l.b16 %v1221
    %v1824 = vunpack.c.h.b16 %v1221
    %v1825 = vunpack.c.l.b16 %v1222
    %v1826 = vunpack.c.h.b16 %v1222
    %v1827 = vunpack.c.l.b16 %v1223
    %v1828 = vunpack.c.h.b16 %v1223
    %v1829 = vunpack.c.l.b16 %v1224
    %v1830 = vunpack.c.h.b16 %v1224
    %v1831 = vunpack.c.l.b16 %v1225
    %v1832 = vunpack.c.h.b16 %v1225
    %v1833 = vunpack.c.l.b16 %v1226
    %v1834 = vunpack.c.h.b16 %v1226
    %v1835 = vunpack.c.l.b16 %v1227
    %v1836 = vunpack.c.h.b16 %v1227
    %v1837 = vunpack.c.l.b16 %v1228
    %v1838 = vunpack.c.h.b16 %v1228
    %v1839 = vunpack.c.l.b16 %v1229
    %v1840 = vunpack.c.h.b16 %v1229
    %v1841 = vunpack.c.l.b16 %v1230
    %v1842 = vunpack.c.h.b16 %v1230
    %v1843 = vunpack.c.l.b16 %v1231
    %v1844 = vunpack.c.h.b16 %v1231
    %v1845 = vunpack.c.l.b16 %v1232
    %v1846 = vunpack.c.h.b16 %v1232
    %v1847 = vunpack.c.l.b16 %v1233
    %v1848 = vunpack.c.h.b16 %v1233
    %v1849 = vunpack.c.l.b16 %v1234
    %v1850 = vunpack.c.h.b16 %v1234
    %v1851 = vunpack.c.l.b16 %v1235
    %v1852 = vunpack.c.h.b16 %v1235
    %v1853 = vunpack.c.l.b16 %v1236
    %v1854 = vunpack.c.h.b16 %v1236
    %v1855 = vunpack.c.l.b16 %v1237
    %v1856 = vunpack.c.h.b16 %v1237
    %v1857 = vunpack.c.l.b16 %v1238
    %v1858 = vunpack.c.h.b16 %v1238
    %v1859 = vunpack.c.l.b16 %v1239
    %v1860 = vunpack.c.h.b16 %v1239
    %v1861 = vunpack.c.l.b16 %v1240
    %v1862 = vunpack.c.h.b16 %v1240
    %v1863 = vunpack.c.l.b16 %v1241
    %v1864 = vunpack.c.h.b16 %v1241
    %v1865 = vunpack.c.l.b16 %v1242
    %v1866 = vunpack.c.h.b16 %v1242
    %v1867 = vunpack.c.l.b16 %v1243
    %v1868 = vunpack.c.h.b16 %v1243
    %v1869 = vunpack.c.l.b16 %v1244
    %v1870 = vunpack.c.h.b16 %v1244
    %v1871 = vunpack.c.l.b16 %v1245
    %v1872 = vunpack.c.h.b16 %v1245
    %v1873 = vunpack.c.l.b16 %v1246
    %v1874 = vunpack.c.h.b16 %v1246
    %v1875 = vunpack.c.l.b16 %v1247
    %v1876 = vunpack.c.h.b16 %v1247
    %v1877 = vunpack.c.l.b16 %v1248
    %v1878 = vunpack.c.h.b16 %v1248
    %v1879 = vunpack.c.l.b16 %v1249
    %v1880 = vunpack.c.h.b16 %v1249
    %v1881 = vunpack.c.l.b16 %v1250
    %v1882 = vunpack.c.h.b16 %v1250
    %v1883 = vunpack.c.l.b16 %v1251
    %v1884 = vunpack.c.h.b16 %v1251
    %v1885 = vunpack.c.l.b16 %v1252
    %v1886 = vunpack.c.h.b16 %v1252
    %v1887 = vunpack.c.l.b16 %v1253
    %v1888 = vunpack.c.h.b16 %v1253
    %v1889 = vunpack.c.l.b16 %v1254
    %v1890 = vunpack.c.h.b16 %v1254
    %v1891 = vunpack.c.l.b16 %v1255
    %v1892 = vunpack.c.h.b16 %v1255
    %v1893 = vunpack.c.l.b16 %v1256
    %v1894 = vunpack.c.h.b16 %v1256
    %v1895 = vunpack.c.l.b16 %v1257
    %v1896 = vunpack.c.h.b16 %v1257
    %v1897 = vunpack.c.l.b16 %v1258
    %v1898 = vunpack.c.h.b16 %v1258
    %v1899 = vunpack.c.l.b16 %v1259
    %v1900 = vunpack.c.h.b16 %v1259
    %v1901 = vunpack.c.l.b16 %v1260
    %v1902 = vunpack.c.h.b16 %v1260
    %v1903 = vunpack.c.l.b16 %v1261
    %v1904 = vunpack.c.h.b16 %v1261
    %v1905 = vunpack.c.l.b16 %v1262
    %v1906 = vunpack.c.h.b16 %v1262
    %v1907 = vunpack.c.l.b16 %v1263
    %v1908 = vunpack.c.h.b16 %v1263
    %v1909 = vunpack.c.l.b16 %v1264
    %v1910 = vunpack.c.h.b16 %v1264
    %v1911 = vunpack.c.l.b16 %v1265
    %v1912 = vunpack.c.h.b16 %v1265
    %v1913 = vunpack.c.l.b16 %v1266
    %v1914 = vunpack.c.h.b16 %v1266
    %v1915 = vunpack.c.l.b16 %v1267
    %v1916 = vunpack.c.h.b16 %v1267
    %v1917 = vunpack.c.l.b16 %v1268
    %v1918 = vunpack.c.h.b16 %v1268
    %v1919 = vunpack.c.l.b16 %v1269
    %v1920 = vunpack.c.h.b16 %v1269
    %v1921 = vunpack.c.l.b16 %v1270
    %v1922 = vunpack.c.h.b16 %v1270
    %v1923 = vunpack.c.l.b16 %v1271
    %v1924 = vunpack.c.h.b16 %v1271
    %v1925 = vunpack.c.l.b16 %v1272
    %v1926 = vunpack.c.h.b16 %v1272
    %v1927 = vunpack.c.l.b16 %v1273
    %v1928 = vunpack.c.h.b16 %v1273
    %v1929 = vunpack.c.l.b16 %v1274
    %v1930 = vunpack.c.h.b16 %v1274
    %v1931 = vunpack.c.l.b16 %v1275
    %v1932 = vunpack.c.h.b16 %v1275
    %v1933 = vunpack.c.l.b16 %v1276
    %v1934 = vunpack.c.h.b16 %v1276
    %v1935 = vunpack.c.l.b16 %v1277
    %v1936 = vunpack.c.h.b16 %v1277
    %v1937 = vunpack.c.l.b16 %v1278
    %v1938 = vunpack.c.h.b16 %v1278
    %v1939 = vunpack.c.l.b16 %v1279
    %v1940 = vunpack.c.h.b16 %v1279
    %v1941 = vunpack.c.l.b16 %v1280
    %v1942 = vunpack.c.h.b16 %v1280
    %v1943 = vunpack.c.l.b16 %v1281
    %v1944 = vunpack.c.h.b16 %v1281
    %v1945 = vunpack.c.l.b16 %v1282
    %v1946 = vunpack.c.h.b16 %v1282
    %v1947 = vunpack.c.l.b16 %v1283
    %v1948 = vunpack.c.h.b16 %v1283
    %v1949 = vunpack.c.l.b16 %v1284
    %v1950 = vunpack.c.h.b16 %v1284
    %v1951 = vunpack.c.l.b16 %v1285
    %v1952 = vunpack.c.h.b16 %v1285
    %v1953 = vunpack.c.l.b16 %v1286
    %v1954 = vunpack.c.h.b16 %v1286
    %v1955 = vunpack.c.l.b16 %v1287
    %v1956 = vunpack.c.h.b16 %v1287
    %v1957 = vunpack.c.l.b16 %v1288
    %v1958 = vunpack.c.h.b16 %v1288
    %v1959 = vunpack.c.l.b16 %v1289
    %v1960 = vunpack.c.h.b16 %v1289
    %v1961 = vunpack.c.l.b16 %v1290
    %v1962 = vunpack.c.h.b16 %v1290
    %v1963 = vunpack.c.l.b16 %v1291
    %v1964 = vunpack.c.h.b16 %v1291
    %v1965 = vunpack.c.l.b16 %v1292
    %v1966 = vunpack.c.h.b16 %v1292
    %v1967 = vunpack.c.l.b16 %v1293
    %v1968 = vunpack.c.h.b16 %v1293
    %v1969 = vunpack.c.l.b16 %v1294
    %v1970 = vunpack.c.h.b16 %v1294
    %v1971 = vunpack.c.l.b16 %v1295
    %v1972 = vunpack.c.h.b16 %v1295
    %v1973 = vunpack.c.l.b16 %v1296
    %v1974 = vunpack.c.h.b16 %v1296
    %v1975 = vunpack.c.l.b16 %v1297
    %v1976 = vunpack.c.h.b16 %v1297
    %v1977 = vunpack.c.l.b16 %v1298
    %v1978 = vunpack.c.h.b16 %v1298
    %v1979 = vunpack.c.l.b16 %v1299
    %v1980 = vunpack.c.h.b16 %v1299
    %v1981 = vunpack.c.l.b16 %v1300
    %v1982 = vunpack.c.h.b16 %v1300
    %v1983 = vunpack.c.l.b16 %v1301
    %v1984 = vunpack.c.h.b16 %v1301
    %v1985 = vunpack.c.l.b16 %v1302
    %v1986 = vunpack.c.h.b16 %v1302
    %v1987 = vunpack.c.l.b16 %v1303
    %v1988 = vunpack.c.h.b16 %v1303
    %v1989 = vunpack.c.l.b16 %v1304
    %v1990 = vunpack.c.h.b16 %v1304
    %v1991 = vunpack.c.l.b16 %v1305
    %v1992 = vunpack.c.h.b16 %v1305
    %v1993 = vunpack.c.l.b16 %v1306
    %v1994 = vunpack.c.h.b16 %v1306
    %v1995 = vunpack.c.l.b16 %v1307
    %v1996 = vunpack.c.h.b16 %v1307
    %v1997 = vunpack.c.l.b16 %v1308
    %v1998 = vunpack.c.h.b16 %v1308
    %v1999 = vunpack.c.l.b16 %v1309
    %v2000 = vunpack.c.h.b16 %v1309
    %v2001 = vunpack.c.l.b16 %v1310
    %v2002 = vunpack.c.h.b16 %v1310
    %v2003 = vunpack.c.l.b16 %v1311
    %v2004 = vunpack.c.h.b16 %v1311
    %v2005 = vunpack.c.l.b16 %v1312
    %v2006 = vunpack.c.h.b16 %v1312
    %v2007 = vunpack.c.l.b16 %v1313
    %v2008 = vunpack.c.h.b16 %v1313
    %v2009 = vunpack.c.l.b16 %v1314
    %v2010 = vunpack.c.h.b16 %v1314
    %v2011 = vunpack.c.l.b16 %v1315
    %v2012 = vunpack.c.h.b16 %v1315
    %v2013 = vunpack.c.l.b16 %v1316
    %v2014 = vunpack.c.h.b16 %v1316
    %v2015 = vunpack.c.l.b16 %v1317
    %v2016 = vunpack.c.h.b16 %v1317
    %v2017 = vunpack.c.l.b16 %v1318
    %v2018 = vunpack.c.h.b16 %v1318
    %v2019 = vunpack.c.l.b16 %v1319
    %v2020 = vunpack.c.h.b16 %v1319
    %v2021 = vunpack.c.l.b16 %v1320
    %v2022 = vunpack.c.h.b16 %v1320
    %v2023 = vunpack.c.l.b16 %v1321
    %v2024 = vunpack.c.h.b16 %v1321
    %v2025 = vunpack.c.l.b16 %v1322
    %v2026 = vunpack.c.h.b16 %v1322
    %v2027 = vunpack.c.l.b16 %v1323
    %v2028 = vunpack.c.h.b16 %v1323
    %v2029 = vunpack.c.l.b16 %v1324
    %v2030 = vunpack.c.h.b16 %v1324
    %v2031 = vunpack.c.l.b16 %v1325
    %v2032 = vunpack.c.h.b16 %v1325
    %v2033 = vunpack.c.l.b16 %v1326
    %v2034 = vunpack.c.h.b16 %v1326
    %v2035 = vunpack.c.l.b16 %v1327
    %v2036 = vunpack.c.h.b16 %v1327
    %v2037 = vunpack.c.l.b16 %v1328
    %v2038 = vunpack.c.h.b16 %v1328
    %v2039 = vunpack.c.l.b16 %v1329
    %v2040 = vunpack.c.h.b16 %v1329
    %v2041 = vunpack.c.l.b16 %v1330
    %v2042 = vunpack.c.h.b16 %v1330
    %v2043 = vunpack.c.l.b16 %v1331
    %v2044 = vunpack.c.h.b16 %v1331
    %v2045 = vunpack.c.l.b16 %v1332
    %v2046 = vunpack.c.h.b16 %v1332
    %v2047 = vunpack.c.l.b16 %v1333
    %v2048 = vunpack.c.h.b16 %v1333
    %v2049 = vunpack.c.l.b16 %v1334
    %v2050 = vunpack.c.h.b16 %v1334
    %v2051 = vunpack.c.l.b16 %v1335
    %v2052 = vunpack.c.h.b16 %v1335
    %v2053 = vunpack.c.l.b16 %v1336
    %v2054 = vunpack.c.h.b16 %v1336
    %v2055 = vunpack.c.l.b16 %v1337
    %v2056 = vunpack.c.h.b16 %v1337
    %v2057 = vunpack.c.l.b16 %v1338
    %v2058 = vunpack.c.h.b16 %v1338
    %v2059 = vunpack.c.l.b16 %v1339
    %v2060 = vunpack.c.h.b16 %v1339
    %v2061 = vunpack.c.l.b16 %v1340
    %v2062 = vunpack.c.h.b16 %v1340
    %v2063 = vunpack.c.l.b16 %v1341
    %v2064 = vunpack.c.h.b16 %v1341
    %v2065 = vunpack.c.l.b16 %v1342
    %v2066 = vunpack.c.h.b16 %v1342
    %v2067 = vunpack.c.l.b16 %v1343
    %v2068 = vunpack.c.h.b16 %v1343
    %v2069 = vunpack.c.l.b16 %v1344
    %v2070 = vunpack.c.h.b16 %v1344
    %v2071 = vunpack.c.l.b16 %v1345
    %v2072 = vunpack.c.h.b16 %v1345
    %v2073 = vunpack.c.l.b16 %v1346
    %v2074 = vunpack.c.h.b16 %v1346
    %v2075 = vunpack.c.l.b16 %v1347
    %v2076 = vunpack.c.h.b16 %v1347
    %v2077 = vunpack.c.l.b16 %v1348
    %v2078 = vunpack.c.h.b16 %v1348
    %v2079 = vunpack.c.l.b16 %v1349
    %v2080 = vunpack.c.h.b16 %v1349
    %v2081 = vunpack.c.l.b16 %v1350
    %v2082 = vunpack.c.h.b16 %v1350
    %v2083 = vunpack.c.l.b16 %v1351
    %v2084 = vunpack.c.h.b16 %v1351
    %v2085 = vunpack.c.l.b16 %v1352
    %v2086 = vunpack.c.h.b16 %v1352
    %v2087 = vunpack.c.l.b16 %v1353
    %v2088 = vunpack.c.h.b16 %v1353
    %v2089 = vunpack.c.l.b16 %v1354
    %v2090 = vunpack.c.h.b16 %v1354
    %v2091 = vunpack.c.l.b16 %v1355
    %v2092 = vunpack.c.h.b16 %v1355
    %v2093 = vunpack.c.l.b16 %v1356
    %v2094 = vunpack.c.h.b16 %v1356
    %v2095 = vunpack.c.l.b16 %v1357
    %v2096 = vunpack.c.h.b16 %v1357
    %v2097 = vunpack.c.l.b16 %v1358
    %v2098 = vunpack.c.h.b16 %v1358
    %v2099 = vunpack.c.l.b16 %v1359
    %v2100 = vunpack.c.h.b16 %v1359
    %v2101 = vunpack.c.l.b16 %v1360
    %v2102 = vunpack.c.h.b16 %v1360
    %v2103 = vunpack.c.l.b16 %v1361
    %v2104 = vunpack.c.h.b16 %v1361
    %v2105 = vunpack.c.l.b16 %v1362
    %v2106 = vunpack.c.h.b16 %v1362
    %v2107 = vunpack.c.l.b16 %v1363
    %v2108 = vunpack.c.h.b16 %v1363
    %v2109 = vunpack.c.l.b16 %v1364
    %v2110 = vunpack.c.h.b16 %v1364
    %v2111 = vunpack.c.l.b16 %v1365
    %v2112 = vunpack.c.h.b16 %v1365
    %v2113 = vunpack.c.l.b16 %v1366
    %v2114 = vunpack.c.h.b16 %v1366
    %v2115 = vunpack.c.l.b16 %v1367
    %v2116 = vunpack.c.h.b16 %v1367
    %v2117 = vunpack.c.l.b16 %v1368
    %v2118 = vunpack.c.h.b16 %v1368
    %v2119 = vunpack.c.l.b16 %v1369
    %v2120 = vunpack.c.h.b16 %v1369
    %v2121 = vunpack.c.l.b16 %v1370
    %v2122 = vunpack.c.h.b16 %v1370
    %v2123 = vunpack.c.l.b16 %v1371
    %v2124 = vunpack.c.h.b16 %v1371
    %v2125 = vunpack.c.l.b16 %v1372
    %v2126 = vunpack.c.h.b16 %v1372
    %v2127 = vunpack.c.l.b16 %v1373
    %v2128 = vunpack.c.h.b16 %v1373
    %v2129 = vunpack.c.l.b16 %v1374
    %v2130 = vunpack.c.h.b16 %v1374
    %v2131 = vunpack.c.l.b16 %v1375
    %v2132 = vunpack.c.h.b16 %v1375
    %v2133 = vunpack.c.l.b16 %v1376
    %v2134 = vunpack.c.h.b16 %v1376
    %v2135 = vunpack.c.l.b16 %v1377
    %v2136 = vunpack.c.h.b16 %v1377
    %v2137 = vunpack.c.l.b16 %v1378
    %v2138 = vunpack.c.h.b16 %v1378
    %v2139 = vunpack.c.l.b16 %v1379
    %v2140 = vunpack.c.h.b16 %v1379
    %v2141 = vunpack.c.l.b16 %v1380
    %v2142 = vunpack.c.h.b16 %v1380
    %v2143 = vunpack.c.l.b16 %v1381
    %v2144 = vunpack.c.h.b16 %v1381
    %v2145 = vunpack.c.l.b16 %v1382
    %v2146 = vunpack.c.h.b16 %v1382
    %v2147 = vunpack.c.l.b16 %v1383
    %v2148 = vunpack.c.h.b16 %v1383
    %v2149 = vunpack.c.l.b16 %v1384
    %v2150 = vunpack.c.h.b16 %v1384
    %v2151 = vunpack.c.l.b16 %v1385
    %v2152 = vunpack.c.h.b16 %v1385
    %v2153 = vunpack.c.l.b16 %v1386
    %v2154 = vunpack.c.h.b16 %v1386
    %v2155 = vunpack.c.l.b16 %v1387
    %v2156 = vunpack.c.h.b16 %v1387
    %v2157 = vunpack.c.l.b16 %v1388
    %v2158 = vunpack.c.h.b16 %v1388
    %v2159 = vunpack.c.l.b16 %v1389
    %v2160 = vunpack.c.h.b16 %v1389
    %v2161 = vunpack.c.l.b16 %v1390
    %v2162 = vunpack.c.h.b16 %v1390
    %v2163 = vunpack.c.l.b16 %v1391
    %v2164 = vunpack.c.h.b16 %v1391
    %v2165 = vunpack.c.l.b16 %v1392
    %v2166 = vunpack.c.h.b16 %v1392
    %v2167 = vunpack.c.l.b16 %v1393
    %v2168 = vunpack.c.h.b16 %v1393
    %v2169 = vunpack.c.l.b16 %v1394
    %v2170 = vunpack.c.h.b16 %v1394
    %v2171 = vunpack.c.l.b16 %v1395
    %v2172 = vunpack.c.h.b16 %v1395
    %v2173 = vunpack.c.l.b16 %v1396
    %v2174 = vunpack.c.h.b16 %v1396
    %v2175 = vpack.c.b16 %v1667, %v1663
    %v2176 = vpack.c.b16 %v1668, %v1664
    %v2177 = vpack.c.b16 %v1669, %v1665
    %v2178 = vpack.c.b16 %v1670, %v1666
    %v2179 = vpack.c.b16 %v1675, %v1671
    %v2180 = vpack.c.b16 %v1676, %v1672
    %v2181 = vpack.c.b16 %v1677, %v1673
    %v2182 = vpack.c.b16 %v1678, %v1674
    %v2183 = vpack.c.b16 %v1683, %v1679
    %v2184 = vpack.c.b16 %v1684, %v1680
    %v2185 = vpack.c.b16 %v1685, %v1681
    %v2186 = vpack.c.b16 %v1686, %v1682
    %v2187 = vpack.c.b16 %v1691, %v1687
    %v2188 = vpack.c.b16 %v1692, %v1688
    %v2189 = vpack.c.b16 %v1693, %v1689
    %v2190 = vpack.c.b16 %v1694, %v1690
    %v2191 = vpack.c.b16 %v1699, %v1695
    %v2192 = vpack.c.b16 %v1700, %v1696
    %v2193 = vpack.c.b16 %v1701, %v1697
    %v2194 = vpack.c.b16 %v1702, %v1698
    %v2195 = vpack.c.b16 %v1707, %v1703
    %v2196 = vpack.c.b16 %v1708, %v1704
    %v2197 = vpack.c.b16 %v1709, %v1705
    %v2198 = vpack.c.b16 %v1710, %v1706
    %v2199 = vpack.c.b16 %v1715, %v1711
    %v2200 = vpack.c.b16 %v1716, %v1712
    %v2201 = vpack.c.b16 %v1717, %v1713
    %v2202 = vpack.c.b16 %v1718, %v1714
    %v2203 = vpack.c.b16 %v1723, %v1719
    %v2204 = vpack.c.b16 %v1724, %v1720
    %v2205 = vpack.c.b16 %v1725, %v1721
    %v2206 = vpack.c.b16 %v1726, %v1722
    %v2207 = vpack.c.b16 %v1731, %v1727
    %v2208 = vpack.c.b16 %v1732, %v1728
    %v2209 = vpack.c.b16 %v1733, %v1729
    %v2210 = vpack.c.b16 %v1734, %v1730
    %v2211 = vpack.c.b16 %v1739, %v1735
    %v2212 = vpack.c.b16 %v1740, %v1736
    %v2213 = vpack.c.b16 %v1741, %v1737
    %v2214 = vpack.c.b16 %v1742, %v1738
    %v2215 = vpack.c.b16 %v1747, %v1743
    %v2216 = vpack.c.b16 %v1748, %v1744
    %v2217 = vpack.c.b16 %v1749, %v1745
    %v2218 = vpack.c.b16 %v1750, %v1746
    %v2219 = vpack.c.b16 %v1755, %v1751
    %v2220 = vpack.c.b16 %v1756, %v1752
    %v2221 = vpack.c.b16 %v1757, %v1753
    %v2222 = vpack.c.b16 %v1758, %v1754
    %v2223 = vpack.c.b16 %v1763, %v1759
    %v2224 = vpack.c.b16 %v1764, %v1760
    %v2225 = vpack.c.b16 %v1765, %v1761
    %v2226 = vpack.c.b16 %v1766, %v1762
    %v2227 = vpack.c.b16 %v1771, %v1767
    %v2228 = vpack.c.b16 %v1772, %v1768
    %v2229 = vpack.c.b16 %v1773, %v1769
    %v2230 = vpack.c.b16 %v1774, %v1770
    %v2231 = vpack.c.b16 %v1779, %v1775
    %v2232 = vpack.c.b16 %v1780, %v1776
    %v2233 = vpack.c.b16 %v1781, %v1777
    %v2234 = vpack.c.b16 %v1782, %v1778
    %v2235 = vpack.c.b16 %v1787, %v1783
    %v2236 = vpack.c.b16 %v1788, %v1784
    %v2237 = vpack.c.b16 %v1789, %v1785
    %v2238 = vpack.c.b16 %v1790, %v1786
    %v2239 = vpack.c.b16 %v1795, %v1791
    %v2240 = vpack.c.b16 %v1796, %v1792
    %v2241 = vpack.c.b16 %v1797, %v1793
    %v2242 = vpack.c.b16 %v1798, %v1794
    %v2243 = vpack.c.b16 %v1803, %v1799
    %v2244 = vpack.c.b16 %v1804, %v1800
    %v2245 = vpack.c.b16 %v1805, %v1801
    %v2246 = vpack.c.b16 %v1806, %v1802
    %v2247 = vpack.c.b16 %v1811, %v1807
    %v2248 = vpack.c.b16 %v1812, %v1808
    %v2249 = vpack.c.b16 %v1813, %v1809
    %v2250 = vpack.c.b16 %v1814, %v1810
    %v2251 = vpack.c.b16 %v1819, %v1815
    %v2252 = vpack.c.b16 %v1820, %v1816
    %v2253 = vpack.c.b16 %v1821, %v1817
    %v2254 = vpack.c.b16 %v1822, %v1818
    %v2255 = vpack.c.b16 %v1827, %v1823
    %v2256 = vpack.c.b16 %v1828, %v1824
    %v2257 = vpack.c.b16 %v1829, %v1825
    %v2258 = vpack.c.b16 %v1830, %v1826
    %v2259 = vpack.c.b16 %v1835, %v1831
    %v2260 = vpack.c.b16 %v1836, %v1832
    %v2261 = vpack.c.b16 %v1837, %v1833
    %v2262 = vpack.c.b16 %v1838, %v1834
    %v2263 = vpack.c.b16 %v1843, %v1839
    %v2264 = vpack.c.b16 %v1844, %v1840
    %v2265 = vpack.c.b16 %v1845, %v1841
    %v2266 = vpack.c.b16 %v1846, %v1842
    %v2267 = vpack.c.b16 %v1851, %v1847
    %v2268 = vpack.c.b16 %v1852, %v1848
    %v2269 = vpack.c.b16 %v1853, %v1849
    %v2270 = vpack.c.b16 %v1854, %v1850
    %v2271 = vpack.c.b16 %v1859, %v1855
    %v2272 = vpack.c.b16 %v1860, %v1856
    %v2273 = vpack.c.b16 %v1861, %v1857
    %v2274 = vpack.c.b16 %v1862, %v1858
    %v2275 = vpack.c.b16 %v1867, %v1863
    %v2276 = vpack.c.b16 %v1868, %v1864
    %v2277 = vpack.c.b16 %v1869, %v1865
    %v2278 = vpack.c.b16 %v1870, %v1866
    %v2279 = vpack.c.b16 %v1875, %v1871
    %v2280 = vpack.c.b16 %v1876, %v1872
    %v2281 = vpack.c.b16 %v1877, %v1873
    %v2282 = vpack.c.b16 %v1878, %v1874
    %v2283 = vpack.c.b16 %v1883, %v1879
    %v2284 = vpack.c.b16 %v1884, %v1880
    %v2285 = vpack.c.b16 %v1885, %v1881
    %v2286 = vpack.c.b16 %v1886, %v1882
    %v2287 = vpack.c.b16 %v1891, %v1887
    %v2288 = vpack.c.b16 %v1892, %v1888
    %v2289 = vpack.c.b16 %v1893, %v1889
    %v2290 = vpack.c.b16 %v1894, %v1890
    %v2291 = vpack.c.b16 %v1899, %v1895
    %v2292 = vpack.c.b16 %v1900, %v1896
    %v2293 = vpack.c.b16 %v1901, %v1897
    %v2294 = vpack.c.b16 %v1902, %v1898
    %v2295 = vpack.c.b16 %v1907, %v1903
    %v2296 = vpack.c.b16 %v1908, %v1904
    %v2297 = vpack.c.b16 %v1909, %v1905
    %v2298 = vpack.c.b16 %v1910, %v1906
    %v2299 = vpack.c.b16 %v1915, %v1911
    %v2300 = vpack.c.b16 %v1916, %v1912
    %v2301 = vpack.c.b16 %v1917, %v1913
    %v2302 = vpack.c.b16 %v1918, %v1914
    %v2303 = vpack.c.b16 %v1923, %v1919
    %v2304 = vpack.c.b16 %v1924, %v1920
    %v2305 = vpack.c.b16 %v1925, %v1921
    %v2306 = vpack.c.b16 %v1926, %v1922
    %v2307 = vpack.c.b16 %v1931, %v1927
    %v2308 = vpack.c.b16 %v1932, %v1928
    %v2309 = vpack.c.b16 %v1933, %v1929
    %v2310 = vpack.c.b16 %v1934, %v1930
    %v2311 = vpack.c.b16 %v1939, %v1935
    %v2312 = vpack.c.b16 %v1940, %v1936
    %v2313 = vpack.c.b16 %v1941, %v1937
    %v2314 = vpack.c.b16 %v1942, %v1938
    %v2315 = vpack.c.b16 %v1947, %v1943
    %v2316 = vpack.c.b16 %v1948, %v1944
    %v2317 = vpack.c.b16 %v1949, %v1945
    %v2318 = vpack.c.b16 %v1950, %v1946
    %v2319 = vpack.c.b16 %v1955, %v1951
    %v2320 = vpack.c.b16 %v1956, %v1952
    %v2321 = vpack.c.b16 %v1957, %v1953
    %v2322 = vpack.c.b16 %v1958, %v1954
    %v2323 = vpack.c.b16 %v1963, %v1959
    %v2324 = vpack.c.b16 %v1964, %v1960
    %v2325 = vpack.c.b16 %v1965, %v1961
    %v2326 = vpack.c.b16 %v1966, %v1962
    %v2327 = vpack.c.b16 %v1971, %v1967
    %v2328 = vpack.c.b16 %v1972, %v1968
    %v2329 = vpack.c.b16 %v1973, %v1969
    %v2330 = vpack.c.b16 %v1974, %v1970
    %v2331 = vpack.c.b16 %v1979, %v1975
    %v2332 = vpack.c.b16 %v1980, %v1976
    %v2333 = vpack.c.b16 %v1981, %v1977
    %v2334 = vpack.c.b16 %v1982, %v1978
    %v2335 = vpack.c.b16 %v1987, %v1983
    %v2336 = vpack.c.b16 %v1988, %v1984
    %v2337 = vpack.c.b16 %v1989, %v1985
    %v2338 = vpack.c.b16 %v1990, %v1986
    %v2339 = vpack.c.b16 %v1995, %v1991
    %v2340 = vpack.c.b16 %v1996, %v1992
    %v2341 = vpack.c.b16 %v1997, %v1993
    %v2342 = vpack.c.b16 %v1998, %v1994
    %v2343 = vpack.c.b16 %v2003, %v1999
    %v2344 = vpack.c.b16 %v2004, %v2000
    %v2345 = vpack.c.b16 %v2005, %v2001
    %v2346 = vpack.c.b16 %v2006, %v2002
    %v2347 = vpack.c.b16 %v2011, %v2007
    %v2348 = vpack.c.b16 %v2012, %v2008
    %v2349 = vpack.c.b16 %v2013, %v2009
    %v2350 = vpack.c.b16 %v2014, %v2010
    %v2351 = vpack.c.b16 %v2019, %v2015
    %v2352 = vpack.c.b16 %v2020, %v2016
    %v2353 = vpack.c.b16 %v2021, %v2017
    %v2354 = vpack.c.b16 %v2022, %v2018
    %v2355 = vpack.c.b16 %v2027, %v2023
    %v2356 = vpack.c.b16 %v2028, %v2024
    %v2357 = vpack.c.b16 %v2029, %v2025
    %v2358 = vpack.c.b16 %v2030, %v2026
    %v2359 = vpack.c.b16 %v2035, %v2031
    %v2360 = vpack.c.b16 %v2036, %v2032
    %v2361 = vpack.c.b16 %v2037, %v2033
    %v2362 = vpack.c.b16 %v2038, %v2034
    %v2363 = vpack.c.b16 %v2043, %v2039
    %v2364 = vpack.c.b16 %v2044, %v2040
    %v2365 = vpack.c.b16 %v2045, %v2041
    %v2366 = vpack.c.b16 %v2046, %v2042
    %v2367 = vpack.c.b16 %v2051, %v2047
    %v2368 = vpack.c.b16 %v2052, %v2048
    %v2369 = vpack.c.b16 %v2053, %v2049
    %v2370 = vpack.c.b16 %v2054, %v2050
    %v2371 = vpack.c.b16 %v2059, %v2055
    %v2372 = vpack.c.b16 %v2060, %v2056
    %v2373 = vpack.c.b16 %v2061, %v2057
    %v2374 = vpack.c.b16 %v2062, %v2058
    %v2375 = vpack.c.b16 %v2067, %v2063
    %v2376 = vpack.c.b16 %v2068, %v2064
    %v2377 = vpack.c.b16 %v2069, %v2065
    %v2378 = vpack.c.b16 %v2070, %v2066
    %v2379 = vpack.c.b16 %v2075, %v2071
    %v2380 = vpack.c.b16 %v2076, %v2072
    %v2381 = vpack.c.b16 %v2077, %v2073
    %v2382 = vpack.c.b16 %v2078, %v2074
    %v2383 = vpack.c.b16 %v2083, %v2079
    %v2384 = vpack.c.b16 %v2084, %v2080
    %v2385 = vpack.c.b16 %v2085, %v2081
    %v2386 = vpack.c.b16 %v2086, %v2082
    %v2387 = vpack.c.b16 %v2091, %v2087
    %v2388 = vpack.c.b16 %v2092, %v2088
    %v2389 = vpack.c.b16 %v2093, %v2089
    %v2390 = vpack.c.b16 %v2094, %v2090
    %v2391 = vpack.c.b16 %v2099, %v2095
    %v2392 = vpack.c.b16 %v2100, %v2096
    %v2393 = vpack.c.b16 %v2101, %v2097
    %v2394 = vpack.c.b16 %v2102, %v2098
    %v2395 = vpack.c.b16 %v2107, %v2103
    %v2396 = vpack.c.b16 %v2108, %v2104
    %v2397 = vpack.c.b16 %v2109, %v2105
    %v2398 = vpack.c.b16 %v2110, %v2106
    %v2399 = vpack.c.b16 %v2115, %v2111
    %v2400 = vpack.c.b16 %v2116, %v2112
    %v2401 = vpack.c.b16 %v2117, %v2113
    %v2402 = vpack.c.b16 %v2118, %v2114
    %v2403 = vpack.c.b16 %v2123, %v2119
    %v2404 = vpack.c.b16 %v2124, %v2120
    %v2405 = vpack.c.b16 %v2125, %v2121
    %v2406 = vpack.c.b16 %v2126, %v2122
    %v2407 = vpack.c.b16 %v2131, %v2127
    %v2408 = vpack.c.b16 %v2132, %v2128
    %v2409 = vpack.c.b16 %v2133, %v2129
    %v2410 = vpack.c.b16 %v2134, %v2130
    %v2411 = vpack.c.b16 %v2139, %v2135
    %v2412 = vpack.c.b16 %v2140, %v2136
    %v2413 = vpack.c.b16 %v2141, %v2137
    %v2414 = vpack.c.b16 %v2142, %v2138
    %v2415 = vpack.c.b16 %v2147, %v2143
    %v2416 = vpack.c.b16 %v2148, %v2144
    %v2417 = vpack.c.b16 %v2149, %v2145
    %v2418 = vpack.c.b16 %v2150, %v2146
    %v2419 = vpack.c.b16 %v2155, %v2151
    %v2420 = vpack.c.b16 %v2156, %v2152
    %v2421 = vpack.c.b16 %v2157, %v2153
    %v2422 = vpack.c.b16 %v2158, %v2154
    %v2423 = vpack.c.b16 %v2163, %v2159
    %v2424 = vpack.c.b16 %v2164, %v2160
    %v2425 = vpack.c.b16 %v2165, %v2161
    %v2426 = vpack.c.b16 %v2166, %v2162
    %v2427 = vpack.c.b16 %v2171, %v2167
    %v2428 = vpack.c.b16 %v2172, %v2168
    %v2429 = vpack.c.b16 %v2173, %v2169
    %v2430 = vpack.c.b16 %v2174, %v2170
    %2687 = vmatpush.bf16.msra.mxu0 %v2203
    %2688 = vmatpush.bf16.msra.mxu0 %v2199
    %2689 = vmatpush.bf16.msra.mxu0 %v2195
    %2690 = vmatpush.bf16.msra.mxu0 %v2191
    %2691 = vmatpush.bf16.msra.mxu0 %v2187
    %2692 = vmatpush.bf16.msra.mxu0 %v2183
    %2693 = vmatpush.bf16.msra.mxu0 %v2179
    %2694 = vmatpush.bf16.msra.mxu0 %v2175
    %2695 = vmatmul.bf16.gmra.mxu0 %v1133
    %v2696 = vpop.f32.mrf.mxu0
    %v2697 = vadd.f32 %v1399, %v2696
    %v2698 = vpop.f32.mrf.mxu0
    %2699 = vdwg.mxu0
    %2700 = vmatpush.bf16.msra.mxu0 %v2235
    %2701 = vmatpush.bf16.msra.mxu0 %v2231
    %2702 = vmatpush.bf16.msra.mxu0 %v2227
    %2703 = vmatpush.bf16.msra.mxu0 %v2223
    %2704 = vmatpush.bf16.msra.mxu0 %v2219
    %2705 = vmatpush.bf16.msra.mxu0 %v2215
    %2706 = vmatpush.bf16.msra.mxu0 %v2211
    %2707 = vmatpush.bf16.msra.mxu0 %v2207
    %2708 = vmatmul.bf16.gmra.mxu0 %v1134
    %v2709 = vpop.f32.mrf.mxu0
    %v2710 = vadd.f32 %v2697, %v2709
    %v2711 = vpop.f32.mrf.mxu0
    %2712 = vdwg.mxu0
    %2713 = vmatpush.bf16.msra.mxu0 %v2267
    %2714 = vmatpush.bf16.msra.mxu0 %v2263
    %2715 = vmatpush.bf16.msra.mxu0 %v2259
    %2716 = vmatpush.bf16.msra.mxu0 %v2255
    %2717 = vmatpush.bf16.msra.mxu0 %v2251
    %2718 = vmatpush.bf16.msra.mxu0 %v2247
    %2719 = vmatpush.bf16.msra.mxu0 %v2243
    %2720 = vmatpush.bf16.msra.mxu0 %v2239
    %2721 = vmatmul.bf16.gmra.mxu0 %v1135
    %v2722 = vpop.f32.mrf.mxu0
    %v2723 = vadd.f32 %v2710, %v2722
    %v2724 = vpop.f32.mrf.mxu0
    %2725 = vdwg.mxu0
    %2726 = vmatpush.bf16.msra.mxu0 %v2299
    %2727 = vmatpush.bf16.msra.mxu0 %v2295
    %2728 = vmatpush.bf16.msra.mxu0 %v2291
    %2729 = vmatpush.bf16.msra.mxu0 %v2287
    %2730 = vmatpush.bf16.msra.mxu0 %v2283
    %2731 = vmatpush.bf16.msra.mxu0 %v2279
    %2732 = vmatpush.bf16.msra.mxu0 %v2275
    %2733 = vmatpush.bf16.msra.mxu0 %v2271
    %2734 = vmatmul.bf16.gmra.mxu0 %v1136
    %v2735 = vpop.f32.mrf.mxu0
    %v2736 = vadd.f32 %v2723, %v2735
    %v2737 = vpop.f32.mrf.mxu0
    %2738 = vdwg.mxu0
    %2739 = vmatpush.bf16.msra.mxu0 %v2331
    %2740 = vmatpush.bf16.msra.mxu0 %v2327
    %2741 = vmatpush.bf16.msra.mxu0 %v2323
    %2742 = vmatpush.bf16.msra.mxu0 %v2319
    %2743 = vmatpush.bf16.msra.mxu0 %v2315
    %2744 = vmatpush.bf16.msra.mxu0 %v2311
    %2745 = vmatpush.bf16.msra.mxu0 %v2307
    %2746 = vmatpush.bf16.msra.mxu0 %v2303
    %2747 = vmatmul.bf16.gmra.mxu0 %v1137
    %v2748 = vpop.f32.mrf.mxu0
    %v2749 = vadd.f32 %v2736, %v2748
    %v2750 = vpop.f32.mrf.mxu0
    %2751 = vdwg.mxu0
    %2752 = vmatpush.bf16.msra.mxu0 %v2363
    %2753 = vmatpush.bf16.msra.mxu0 %v2359
    %2754 = vmatpush.bf16.msra.mxu0 %v2355
    %2755 = vmatpush.bf16.msra.mxu0 %v2351
    %2756 = vmatpush.bf16.msra.mxu0 %v2347
    %2757 = vmatpush.bf16.msra.mxu0 %v2343
    %2758 = vmatpush.bf16.msra.mxu0 %v2339
    %2759 = vmatpush.bf16.msra.mxu0 %v2335
    %2760 = vmatmul.bf16.gmra.mxu0 %v1138
    %v2761 = vpop.f32.mrf.mxu0
    %v2762 = vadd.f32 %v2749, %v2761
    %v2763 = vpop.f32.mrf.mxu0
    %2764 = vdwg.mxu0
    %2765 = vmatpush.bf16.msra.mxu0 %v2395
    %2766 = vmatpush.bf16.msra.mxu0 %v2391
    %2767 = vmatpush.bf16.msra.mxu0 %v2387
    %2768 = vmatpush.bf16.msra.mxu0 %v2383
    %2769 = vmatpush.bf16.msra.mxu0 %v2379
    %2770 = vmatpush.bf16.msra.mxu0 %v2375
    %2771 = vmatpush.bf16.msra.mxu0 %v2371
    %2772 = vmatpush.bf16.msra.mxu0 %v2367
    %2773 = vmatmul.bf16.gmra.mxu0 %v1139
    %v2774 = vpop.f32.mrf.mxu0
    %v2775 = vadd.f32 %v2762, %v2774
    %v2776 = vpop.f32.mrf.mxu0
    %2777 = vdwg.mxu0
    %2778 = vmatpush.bf16.msra.mxu0 %v2427
    %2779 = vmatpush.bf16.msra.mxu0 %v2423
    %2780 = vmatpush.bf16.msra.mxu0 %v2419
    %2781 = vmatpush.bf16.msra.mxu0 %v2415
    %2782 = vmatpush.bf16.msra.mxu0 %v2411
    %2783 = vmatpush.bf16.msra.mxu0 %v2407
    %2784 = vmatpush.bf16.msra.mxu0 %v2403
    %2785 = vmatpush.bf16.msra.mxu0 %v2399
    %2786 = vmatmul.bf16.gmra.mxu0 %v1140
    %v2787 = vpop.f32.mrf.mxu0
    %v2788 = vadd.f32 %v2775, %v2787
    %v2789 = vpop.f32.mrf.mxu0
    %2790 = vdwg.mxu0
    %2791 = vmatpush.bf16.msra.mxu0 %v2204
    %2792 = vmatpush.bf16.msra.mxu0 %v2200
    %2793 = vmatpush.bf16.msra.mxu0 %v2196
    %2794 = vmatpush.bf16.msra.mxu0 %v2192
    %2795 = vmatpush.bf16.msra.mxu0 %v2188
    %2796 = vmatpush.bf16.msra.mxu0 %v2184
    %2797 = vmatpush.bf16.msra.mxu0 %v2180
    %2798 = vmatpush.bf16.msra.mxu0 %v2176
    %2799 = vmatmul.bf16.gmra.mxu0 %v1133
    %v2800 = vpop.f32.mrf.mxu0
    %v2801 = vadd.f32 %v1400, %v2800
    %v2802 = vpop.f32.mrf.mxu0
    %2803 = vdwg.mxu0
    %2804 = vmatpush.bf16.msra.mxu0 %v2236
    %2805 = vmatpush.bf16.msra.mxu0 %v2232
    %2806 = vmatpush.bf16.msra.mxu0 %v2228
    %2807 = vmatpush.bf16.msra.mxu0 %v2224
    %2808 = vmatpush.bf16.msra.mxu0 %v2220
    %2809 = vmatpush.bf16.msra.mxu0 %v2216
    %2810 = vmatpush.bf16.msra.mxu0 %v2212
    %2811 = vmatpush.bf16.msra.mxu0 %v2208
    %2812 = vmatmul.bf16.gmra.mxu0 %v1134
    %v2813 = vpop.f32.mrf.mxu0
    %v2814 = vadd.f32 %v2801, %v2813
    %v2815 = vpop.f32.mrf.mxu0
    %2816 = vdwg.mxu0
    %2817 = vmatpush.bf16.msra.mxu0 %v2268
    %2818 = vmatpush.bf16.msra.mxu0 %v2264
    %2819 = vmatpush.bf16.msra.mxu0 %v2260
    %2820 = vmatpush.bf16.msra.mxu0 %v2256
    %2821 = vmatpush.bf16.msra.mxu0 %v2252
    %2822 = vmatpush.bf16.msra.mxu0 %v2248
    %2823 = vmatpush.bf16.msra.mxu0 %v2244
    %2824 = vmatpush.bf16.msra.mxu0 %v2240
    %2825 = vmatmul.bf16.gmra.mxu0 %v1135
    %v2826 = vpop.f32.mrf.mxu0
    %v2827 = vadd.f32 %v2814, %v2826
    %v2828 = vpop.f32.mrf.mxu0
    %2829 = vdwg.mxu0
    %2830 = vmatpush.bf16.msra.mxu0 %v2300
    %2831 = vmatpush.bf16.msra.mxu0 %v2296
    %2832 = vmatpush.bf16.msra.mxu0 %v2292
    %2833 = vmatpush.bf16.msra.mxu0 %v2288
    %2834 = vmatpush.bf16.msra.mxu0 %v2284
    %2835 = vmatpush.bf16.msra.mxu0 %v2280
    %2836 = vmatpush.bf16.msra.mxu0 %v2276
    %2837 = vmatpush.bf16.msra.mxu0 %v2272
    %2838 = vmatmul.bf16.gmra.mxu0 %v1136
    %v2839 = vpop.f32.mrf.mxu0
    %v2840 = vadd.f32 %v2827, %v2839
    %v2841 = vpop.f32.mrf.mxu0
    %2842 = vdwg.mxu0
    %2843 = vmatpush.bf16.msra.mxu0 %v2332
    %2844 = vmatpush.bf16.msra.mxu0 %v2328
    %2845 = vmatpush.bf16.msra.mxu0 %v2324
    %2846 = vmatpush.bf16.msra.mxu0 %v2320
    %2847 = vmatpush.bf16.msra.mxu0 %v2316
    %2848 = vmatpush.bf16.msra.mxu0 %v2312
    %2849 = vmatpush.bf16.msra.mxu0 %v2308
    %2850 = vmatpush.bf16.msra.mxu0 %v2304
    %2851 = vmatmul.bf16.gmra.mxu0 %v1137
    %v2852 = vpop.f32.mrf.mxu0
    %v2853 = vadd.f32 %v2840, %v2852
    %v2854 = vpop.f32.mrf.mxu0
    %2855 = vdwg.mxu0
    %2856 = vmatpush.bf16.msra.mxu0 %v2364
    %2857 = vmatpush.bf16.msra.mxu0 %v2360
    %2858 = vmatpush.bf16.msra.mxu0 %v2356
    %2859 = vmatpush.bf16.msra.mxu0 %v2352
    %2860 = vmatpush.bf16.msra.mxu0 %v2348
    %2861 = vmatpush.bf16.msra.mxu0 %v2344
    %2862 = vmatpush.bf16.msra.mxu0 %v2340
    %2863 = vmatpush.bf16.msra.mxu0 %v2336
    %2864 = vmatmul.bf16.gmra.mxu0 %v1138
    %v2865 = vpop.f32.mrf.mxu0
    %v2866 = vadd.f32 %v2853, %v2865
    %v2867 = vpop.f32.mrf.mxu0
    %2868 = vdwg.mxu0
    %2869 = vmatpush.bf16.msra.mxu0 %v2396
    %2870 = vmatpush.bf16.msra.mxu0 %v2392
    %2871 = vmatpush.bf16.msra.mxu0 %v2388
    %2872 = vmatpush.bf16.msra.mxu0 %v2384
    %2873 = vmatpush.bf16.msra.mxu0 %v2380
    %2874 = vmatpush.bf16.msra.mxu0 %v2376
    %2875 = vmatpush.bf16.msra.mxu0 %v2372
    %2876 = vmatpush.bf16.msra.mxu0 %v2368
    %2877 = vmatmul.bf16.gmra.mxu0 %v1139
    %v2878 = vpop.f32.mrf.mxu0
    %v2879 = vadd.f32 %v2866, %v2878
    %v2880 = vpop.f32.mrf.mxu0
    %2881 = vdwg.mxu0
    %2882 = vmatpush.bf16.msra.mxu0 %v2428
    %2883 = vmatpush.bf16.msra.mxu0 %v2424
    %2884 = vmatpush.bf16.msra.mxu0 %v2420
    %2885 = vmatpush.bf16.msra.mxu0 %v2416
    %2886 = vmatpush.bf16.msra.mxu0 %v2412
    %2887 = vmatpush.bf16.msra.mxu0 %v2408
    %2888 = vmatpush.bf16.msra.mxu0 %v2404
    %2889 = vmatpush.bf16.msra.mxu0 %v2400
    %2890 = vmatmul.bf16.gmra.mxu0 %v1140
    %v2891 = vpop.f32.mrf.mxu0
    %v2892 = vadd.f32 %v2879, %v2891
    %v2893 = vpop.f32.mrf.mxu0
    %2894 = vdwg.mxu0
    %2895 = vmatpush.bf16.msra.mxu0 %v2205
    %2896 = vmatpush.bf16.msra.mxu0 %v2201
    %2897 = vmatpush.bf16.msra.mxu0 %v2197
    %2898 = vmatpush.bf16.msra.mxu0 %v2193
    %2899 = vmatpush.bf16.msra.mxu0 %v2189
    %2900 = vmatpush.bf16.msra.mxu0 %v2185
    %2901 = vmatpush.bf16.msra.mxu0 %v2181
    %2902 = vmatpush.bf16.msra.mxu0 %v2177
    %2903 = vmatmul.bf16.gmra.mxu0 %v1133
    %v2904 = vpop.f32.mrf.mxu0
    %v2905 = vadd.f32 %v1401, %v2904
    %v2906 = vpop.f32.mrf.mxu0
    %2907 = vdwg.mxu0
    %2908 = vmatpush.bf16.msra.mxu0 %v2237
    %2909 = vmatpush.bf16.msra.mxu0 %v2233
    %2910 = vmatpush.bf16.msra.mxu0 %v2229
    %2911 = vmatpush.bf16.msra.mxu0 %v2225
    %2912 = vmatpush.bf16.msra.mxu0 %v2221
    %2913 = vmatpush.bf16.msra.mxu0 %v2217
    %2914 = vmatpush.bf16.msra.mxu0 %v2213
    %2915 = vmatpush.bf16.msra.mxu0 %v2209
    %2916 = vmatmul.bf16.gmra.mxu0 %v1134
    %v2917 = vpop.f32.mrf.mxu0
    %v2918 = vadd.f32 %v2905, %v2917
    %v2919 = vpop.f32.mrf.mxu0
    %2920 = vdwg.mxu0
    %2921 = vmatpush.bf16.msra.mxu0 %v2269
    %2922 = vmatpush.bf16.msra.mxu0 %v2265
    %2923 = vmatpush.bf16.msra.mxu0 %v2261
    %2924 = vmatpush.bf16.msra.mxu0 %v2257
    %2925 = vmatpush.bf16.msra.mxu0 %v2253
    %2926 = vmatpush.bf16.msra.mxu0 %v2249
    %2927 = vmatpush.bf16.msra.mxu0 %v2245
    %2928 = vmatpush.bf16.msra.mxu0 %v2241
    %2929 = vmatmul.bf16.gmra.mxu0 %v1135
    %v2930 = vpop.f32.mrf.mxu0
    %v2931 = vadd.f32 %v2918, %v2930
    %v2932 = vpop.f32.mrf.mxu0
    %2933 = vdwg.mxu0
    %2934 = vmatpush.bf16.msra.mxu0 %v2301
    %2935 = vmatpush.bf16.msra.mxu0 %v2297
    %2936 = vmatpush.bf16.msra.mxu0 %v2293
    %2937 = vmatpush.bf16.msra.mxu0 %v2289
    %2938 = vmatpush.bf16.msra.mxu0 %v2285
    %2939 = vmatpush.bf16.msra.mxu0 %v2281
    %2940 = vmatpush.bf16.msra.mxu0 %v2277
    %2941 = vmatpush.bf16.msra.mxu0 %v2273
    %2942 = vmatmul.bf16.gmra.mxu0 %v1136
    %v2943 = vpop.f32.mrf.mxu0
    %v2944 = vadd.f32 %v2931, %v2943
    %v2945 = vpop.f32.mrf.mxu0
    %2946 = vdwg.mxu0
    %2947 = vmatpush.bf16.msra.mxu0 %v2333
    %2948 = vmatpush.bf16.msra.mxu0 %v2329
    %2949 = vmatpush.bf16.msra.mxu0 %v2325
    %2950 = vmatpush.bf16.msra.mxu0 %v2321
    %2951 = vmatpush.bf16.msra.mxu0 %v2317
    %2952 = vmatpush.bf16.msra.mxu0 %v2313
    %2953 = vmatpush.bf16.msra.mxu0 %v2309
    %2954 = vmatpush.bf16.msra.mxu0 %v2305
    %2955 = vmatmul.bf16.gmra.mxu0 %v1137
    %v2956 = vpop.f32.mrf.mxu0
    %v2957 = vadd.f32 %v2944, %v2956
    %v2958 = vpop.f32.mrf.mxu0
    %2959 = vdwg.mxu0
    %2960 = vmatpush.bf16.msra.mxu0 %v2365
    %2961 = vmatpush.bf16.msra.mxu0 %v2361
    %2962 = vmatpush.bf16.msra.mxu0 %v2357
    %2963 = vmatpush.bf16.msra.mxu0 %v2353
    %2964 = vmatpush.bf16.msra.mxu0 %v2349
    %2965 = vmatpush.bf16.msra.mxu0 %v2345
    %2966 = vmatpush.bf16.msra.mxu0 %v2341
    %2967 = vmatpush.bf16.msra.mxu0 %v2337
    %2968 = vmatmul.bf16.gmra.mxu0 %v1138
    %v2969 = vpop.f32.mrf.mxu0
    %v2970 = vadd.f32 %v2957, %v2969
    %v2971 = vpop.f32.mrf.mxu0
    %2972 = vdwg.mxu0
    %2973 = vmatpush.bf16.msra.mxu0 %v2397
    %2974 = vmatpush.bf16.msra.mxu0 %v2393
    %2975 = vmatpush.bf16.msra.mxu0 %v2389
    %2976 = vmatpush.bf16.msra.mxu0 %v2385
    %2977 = vmatpush.bf16.msra.mxu0 %v2381
    %2978 = vmatpush.bf16.msra.mxu0 %v2377
    %2979 = vmatpush.bf16.msra.mxu0 %v2373
    %2980 = vmatpush.bf16.msra.mxu0 %v2369
    %2981 = vmatmul.bf16.gmra.mxu0 %v1139
    %v2982 = vpop.f32.mrf.mxu0
    %v2983 = vadd.f32 %v2970, %v2982
    %v2984 = vpop.f32.mrf.mxu0
    %2985 = vdwg.mxu0
    %2986 = vmatpush.bf16.msra.mxu0 %v2429
    %2987 = vmatpush.bf16.msra.mxu0 %v2425
    %2988 = vmatpush.bf16.msra.mxu0 %v2421
    %2989 = vmatpush.bf16.msra.mxu0 %v2417
    %2990 = vmatpush.bf16.msra.mxu0 %v2413
    %2991 = vmatpush.bf16.msra.mxu0 %v2409
    %2992 = vmatpush.bf16.msra.mxu0 %v2405
    %2993 = vmatpush.bf16.msra.mxu0 %v2401
    %2994 = vmatmul.bf16.gmra.mxu0 %v1140
    %v2995 = vpop.f32.mrf.mxu0
    %v2996 = vadd.f32 %v2983, %v2995
    %v2997 = vpop.f32.mrf.mxu0
    %2998 = vdwg.mxu0
    %2999 = vmatpush.bf16.msra.mxu0 %v2206
    %3000 = vmatpush.bf16.msra.mxu0 %v2202
    %3001 = vmatpush.bf16.msra.mxu0 %v2198
    %3002 = vmatpush.bf16.msra.mxu0 %v2194
    %3003 = vmatpush.bf16.msra.mxu0 %v2190
    %3004 = vmatpush.bf16.msra.mxu0 %v2186
    %3005 = vmatpush.bf16.msra.mxu0 %v2182
    %3006 = vmatpush.bf16.msra.mxu0 %v2178
    %3007 = vmatmul.bf16.gmra.mxu0 %v1133
    %v3008 = vpop.f32.mrf.mxu0
    %v3009 = vadd.f32 %v1402, %v3008
    %v3010 = vpop.f32.mrf.mxu0
    %3011 = vdwg.mxu0
    %3012 = vmatpush.bf16.msra.mxu0 %v2238
    %3013 = vmatpush.bf16.msra.mxu0 %v2234
    %3014 = vmatpush.bf16.msra.mxu0 %v2230
    %3015 = vmatpush.bf16.msra.mxu0 %v2226
    %3016 = vmatpush.bf16.msra.mxu0 %v2222
    %3017 = vmatpush.bf16.msra.mxu0 %v2218
    %3018 = vmatpush.bf16.msra.mxu0 %v2214
    %3019 = vmatpush.bf16.msra.mxu0 %v2210
    %3020 = vmatmul.bf16.gmra.mxu0 %v1134
    %v3021 = vpop.f32.mrf.mxu0
    %v3022 = vadd.f32 %v3009, %v3021
    %v3023 = vpop.f32.mrf.mxu0
    %3024 = vdwg.mxu0
    %3025 = vmatpush.bf16.msra.mxu0 %v2270
    %3026 = vmatpush.bf16.msra.mxu0 %v2266
    %3027 = vmatpush.bf16.msra.mxu0 %v2262
    %3028 = vmatpush.bf16.msra.mxu0 %v2258
    %3029 = vmatpush.bf16.msra.mxu0 %v2254
    %3030 = vmatpush.bf16.msra.mxu0 %v2250
    %3031 = vmatpush.bf16.msra.mxu0 %v2246
    %3032 = vmatpush.bf16.msra.mxu0 %v2242
    %3033 = vmatmul.bf16.gmra.mxu0 %v1135
    %v3034 = vpop.f32.mrf.mxu0
    %v3035 = vadd.f32 %v3022, %v3034
    %v3036 = vpop.f32.mrf.mxu0
    %3037 = vdwg.mxu0
    %3038 = vmatpush.bf16.msra.mxu0 %v2302
    %3039 = vmatpush.bf16.msra.mxu0 %v2298
    %3040 = vmatpush.bf16.msra.mxu0 %v2294
    %3041 = vmatpush.bf16.msra.mxu0 %v2290
    %3042 = vmatpush.bf16.msra.mxu0 %v2286
    %3043 = vmatpush.bf16.msra.mxu0 %v2282
    %3044 = vmatpush.bf16.msra.mxu0 %v2278
    %3045 = vmatpush.bf16.msra.mxu0 %v2274
    %3046 = vmatmul.bf16.gmra.mxu0 %v1136
    %v3047 = vpop.f32.mrf.mxu0
    %v3048 = vadd.f32 %v3035, %v3047
    %v3049 = vpop.f32.mrf.mxu0
    %3050 = vdwg.mxu0
    %3051 = vmatpush.bf16.msra.mxu0 %v2334
    %3052 = vmatpush.bf16.msra.mxu0 %v2330
    %3053 = vmatpush.bf16.msra.mxu0 %v2326
    %3054 = vmatpush.bf16.msra.mxu0 %v2322
    %3055 = vmatpush.bf16.msra.mxu0 %v2318
    %3056 = vmatpush.bf16.msra.mxu0 %v2314
    %3057 = vmatpush.bf16.msra.mxu0 %v2310
    %3058 = vmatpush.bf16.msra.mxu0 %v2306
    %3059 = vmatmul.bf16.gmra.mxu0 %v1137
    %v3060 = vpop.f32.mrf.mxu0
    %v3061 = vadd.f32 %v3048, %v3060
    %v3062 = vpop.f32.mrf.mxu0
    %3063 = vdwg.mxu0
    %3064 = vmatpush.bf16.msra.mxu0 %v2366
    %3065 = vmatpush.bf16.msra.mxu0 %v2362
    %3066 = vmatpush.bf16.msra.mxu0 %v2358
    %3067 = vmatpush.bf16.msra.mxu0 %v2354
    %3068 = vmatpush.bf16.msra.mxu0 %v2350
    %3069 = vmatpush.bf16.msra.mxu0 %v2346
    %3070 = vmatpush.bf16.msra.mxu0 %v2342
    %3071 = vmatpush.bf16.msra.mxu0 %v2338
    %3072 = vmatmul.bf16.gmra.mxu0 %v1138
    %v3073 = vpop.f32.mrf.mxu0
    %v3074 = vadd.f32 %v3061, %v3073
    %v3075 = vpop.f32.mrf.mxu0
    %3076 = vdwg.mxu0
    %3077 = vmatpush.bf16.msra.mxu0 %v2398
    %3078 = vmatpush.bf16.msra.mxu0 %v2394
    %3079 = vmatpush.bf16.msra.mxu0 %v2390
    %3080 = vmatpush.bf16.msra.mxu0 %v2386
    %3081 = vmatpush.bf16.msra.mxu0 %v2382
    %3082 = vmatpush.bf16.msra.mxu0 %v2378
    %3083 = vmatpush.bf16.msra.mxu0 %v2374
    %3084 = vmatpush.bf16.msra.mxu0 %v2370
    %3085 = vmatmul.bf16.gmra.mxu0 %v1139
    %v3086 = vpop.f32.mrf.mxu0
    %v3087 = vadd.f32 %v3074, %v3086
    %v3088 = vpop.f32.mrf.mxu0
    %3089 = vdwg.mxu0
    %3090 = vmatpush.bf16.msra.mxu0 %v2430
    %3091 = vmatpush.bf16.msra.mxu0 %v2426
    %3092 = vmatpush.bf16.msra.mxu0 %v2422
    %3093 = vmatpush.bf16.msra.mxu0 %v2418
    %3094 = vmatpush.bf16.msra.mxu0 %v2414
    %3095 = vmatpush.bf16.msra.mxu0 %v2410
    %3096 = vmatpush.bf16.msra.mxu0 %v2406
    %3097 = vmatpush.bf16.msra.mxu0 %v2402
    %3098 = vmatmul.bf16.gmra.mxu0 %v1140
    %v3099 = vpop.f32.mrf.mxu0
    %v3100 = vadd.f32 %v3087, %v3099
    %v3101 = vpop.f32.mrf.mxu0
    %3102 = vdwg.mxu0
    %v3103 = vpack.c.bf16 %v2892, %v2788
    %v3104 = vpack.c.bf16 %v3100, %v2996
    %v3105 = vunpack.c.l.bf16 %v3103
    %v3106 = vunpack.c.h.bf16 %v3103
    %v3107 = vunpack.c.l.bf16 %v3104
    %v3108 = vunpack.c.h.bf16 %v3104
    %v3109 = vmax.f32 %v3105, 0.0
    %v3110 = vmax.f32 %v3106, 0.0
    %v3111 = vmax.f32 %v3107, 0.0
    %v3112 = vmax.f32 %v3108, 0.0
    %v3113 = vpack.c.bf16 %v3109, %v3109
    %v3114 = vpack.c.bf16 %v3110, %v3110
    %v3115 = vpack.c.bf16 %v3111, %v3111
    %v3116 = vpack.c.bf16 %v3112, %v3112
    %v3117 = vld [vmem:[#allocation11] sm:$0xf]
    %v3118 = vld [vmem:[#allocation11 + $0x4] sm:$0xf]
    %v3119 = vld [vmem:[#allocation11 + $0x8] sm:$0xf]
    %v3120 = vld [vmem:[#allocation11 + $0xc] sm:$0xf]
    %v3121 = vld [vmem:[#allocation11 + $0x10] sm:$0xf]
    %v3122 = vld [vmem:[#allocation11 + $0x14] sm:$0xf]
    %v3123 = vld [vmem:[#allocation11 + $0x18] sm:$0xf]
    %v3124 = vld [vmem:[#allocation11 + $0x1c] sm:$0xf]
    %v3125 = vld [vmem:[#allocation11 + $0x20] sm:$0xf]
    %v3126 = vld [vmem:[#allocation11 + $0x24] sm:$0xf]
    %v3127 = vld [vmem:[#allocation11 + $0x28] sm:$0xf]
    %v3128 = vld [vmem:[#allocation11 + $0x2c] sm:$0xf]
    %v3129 = vld [vmem:[#allocation11 + $0x30] sm:$0xf]
    %v3130 = vld [vmem:[#allocation11 + $0x34] sm:$0xf]
    %v3131 = vld [vmem:[#allocation11 + $0x38] sm:$0xf]
    %v3132 = vld [vmem:[#allocation11 + $0x3c] sm:$0xf]
    %v3133 = vld [vmem:[#allocation11 + $0x40] sm:$0xf]
    %v3134 = vld [vmem:[#allocation11 + $0x44] sm:$0xf]
    %v3135 = vld [vmem:[#allocation11 + $0x48] sm:$0xf]
    %v3136 = vld [vmem:[#allocation11 + $0x4c] sm:$0xf]
    %v3137 = vld [vmem:[#allocation11 + $0x50] sm:$0xf]
    %v3138 = vld [vmem:[#allocation11 + $0x54] sm:$0xf]
    %v3139 = vld [vmem:[#allocation11 + $0x58] sm:$0xf]
    %v3140 = vld [vmem:[#allocation11 + $0x5c] sm:$0xf]
    %v3141 = vld [vmem:[#allocation11 + $0x60] sm:$0xf]
    %v3142 = vld [vmem:[#allocation11 + $0x64] sm:$0xf]
    %v3143 = vld [vmem:[#allocation11 + $0x68] sm:$0xf]
    %v3144 = vld [vmem:[#allocation11 + $0x6c] sm:$0xf]
    %v3145 = vld [vmem:[#allocation11 + $0x70] sm:$0xf]
    %v3146 = vld [vmem:[#allocation11 + $0x74] sm:$0xf]
    %v3147 = vld [vmem:[#allocation11 + $0x78] sm:$0xf]
    %v3148 = vld [vmem:[#allocation11 + $0x7c] sm:$0xf]
    %v3149 = vld [vmem:[#allocation11 + $0x80] sm:$0xf]
    %v3150 = vld [vmem:[#allocation11 + $0x84] sm:$0xf]
    %v3151 = vld [vmem:[#allocation11 + $0x88] sm:$0xf]
    %v3152 = vld [vmem:[#allocation11 + $0x8c] sm:$0xf]
    %v3153 = vld [vmem:[#allocation11 + $0x90] sm:$0xf]
    %v3154 = vld [vmem:[#allocation11 + $0x94] sm:$0xf]
    %v3155 = vld [vmem:[#allocation11 + $0x98] sm:$0xf]
    %v3156 = vld [vmem:[#allocation11 + $0x9c] sm:$0xf]
    %v3157 = vld [vmem:[#allocation11 + $0xa0] sm:$0xf]
    %v3158 = vld [vmem:[#allocation11 + $0xa4] sm:$0xf]
    %v3159 = vld [vmem:[#allocation11 + $0xa8] sm:$0xf]
    %v3160 = vld [vmem:[#allocation11 + $0xac] sm:$0xf]
    %v3161 = vld [vmem:[#allocation11 + $0xb0] sm:$0xf]
    %v3162 = vld [vmem:[#allocation11 + $0xb4] sm:$0xf]
    %v3163 = vld [vmem:[#allocation11 + $0xb8] sm:$0xf]
    %v3164 = vld [vmem:[#allocation11 + $0xbc] sm:$0xf]
    %v3165 = vld [vmem:[#allocation11 + $0xc0] sm:$0xf]
    %v3166 = vld [vmem:[#allocation11 + $0xc4] sm:$0xf]
    %v3167 = vld [vmem:[#allocation11 + $0xc8] sm:$0xf]
    %v3168 = vld [vmem:[#allocation11 + $0xcc] sm:$0xf]
    %v3169 = vld [vmem:[#allocation11 + $0xd0] sm:$0xf]
    %v3170 = vld [vmem:[#allocation11 + $0xd4] sm:$0xf]
    %v3171 = vld [vmem:[#allocation11 + $0xd8] sm:$0xf]
    %v3172 = vld [vmem:[#allocation11 + $0xdc] sm:$0xf]
    %v3173 = vld [vmem:[#allocation11 + $0xe0] sm:$0xf]
    %v3174 = vld [vmem:[#allocation11 + $0xe4] sm:$0xf]
    %v3175 = vld [vmem:[#allocation11 + $0xe8] sm:$0xf]
    %v3176 = vld [vmem:[#allocation11 + $0xec] sm:$0xf]
    %v3177 = vld [vmem:[#allocation11 + $0xf0] sm:$0xf]
    %v3178 = vld [vmem:[#allocation11 + $0xf4] sm:$0xf]
    %v3179 = vld [vmem:[#allocation11 + $0xf8] sm:$0xf]
    %v3180 = vld [vmem:[#allocation11 + $0xfc] sm:$0xf]
    %v3181 = vld [vmem:[%s6] sm:$0x1]
    %v3183 = vperm.slane %v3181, 0
    %v3249 = vunpack.c.l.b16 %v3117
    %v3250 = vunpack.c.l.b16 %v3118
    %v3251 = vunpack.c.l.b16 %v3119
    %v3252 = vunpack.c.l.b16 %v3120
    %v3253 = vunpack.c.l.b16 %v3121
    %v3254 = vunpack.c.l.b16 %v3122
    %v3255 = vunpack.c.l.b16 %v3123
    %v3256 = vunpack.c.l.b16 %v3124
    %v3257 = vunpack.c.l.b16 %v3125
    %v3258 = vunpack.c.l.b16 %v3126
    %v3259 = vunpack.c.l.b16 %v3127
    %v3260 = vunpack.c.l.b16 %v3128
    %v3261 = vunpack.c.l.b16 %v3129
    %v3262 = vunpack.c.l.b16 %v3130
    %v3263 = vunpack.c.l.b16 %v3131
    %v3264 = vunpack.c.l.b16 %v3132
    %v3265 = vunpack.c.l.b16 %v3133
    %v3266 = vunpack.c.l.b16 %v3134
    %v3267 = vunpack.c.l.b16 %v3135
    %v3268 = vunpack.c.l.b16 %v3136
    %v3269 = vunpack.c.l.b16 %v3137
    %v3270 = vunpack.c.l.b16 %v3138
    %v3271 = vunpack.c.l.b16 %v3139
    %v3272 = vunpack.c.l.b16 %v3140
    %v3273 = vunpack.c.l.b16 %v3141
    %v3274 = vunpack.c.l.b16 %v3142
    %v3275 = vunpack.c.l.b16 %v3143
    %v3276 = vunpack.c.l.b16 %v3144
    %v3277 = vunpack.c.l.b16 %v3145
    %v3278 = vunpack.c.l.b16 %v3146
    %v3279 = vunpack.c.l.b16 %v3147
    %v3280 = vunpack.c.l.b16 %v3148
    %v3281 = vunpack.c.l.b16 %v3149
    %v3282 = vunpack.c.l.b16 %v3150
    %v3283 = vunpack.c.l.b16 %v3151
    %v3284 = vunpack.c.l.b16 %v3152
    %v3285 = vunpack.c.l.b16 %v3153
    %v3286 = vunpack.c.l.b16 %v3154
    %v3287 = vunpack.c.l.b16 %v3155
    %v3288 = vunpack.c.l.b16 %v3156
    %v3289 = vunpack.c.l.b16 %v3157
    %v3290 = vunpack.c.l.b16 %v3158
    %v3291 = vunpack.c.l.b16 %v3159
    %v3292 = vunpack.c.l.b16 %v3160
    %v3293 = vunpack.c.l.b16 %v3161
    %v3294 = vunpack.c.l.b16 %v3162
    %v3295 = vunpack.c.l.b16 %v3163
    %v3296 = vunpack.c.l.b16 %v3164
    %v3297 = vunpack.c.l.b16 %v3165
    %v3298 = vunpack.c.l.b16 %v3166
    %v3299 = vunpack.c.l.b16 %v3167
    %v3300 = vunpack.c.l.b16 %v3168
    %v3301 = vunpack.c.l.b16 %v3169
    %v3302 = vunpack.c.l.b16 %v3170
    %v3303 = vunpack.c.l.b16 %v3171
    %v3304 = vunpack.c.l.b16 %v3172
    %v3305 = vunpack.c.l.b16 %v3173
    %v3306 = vunpack.c.l.b16 %v3174
    %v3307 = vunpack.c.l.b16 %v3175
    %v3308 = vunpack.c.l.b16 %v3176
    %v3309 = vunpack.c.l.b16 %v3177
    %v3310 = vunpack.c.l.b16 %v3178
    %v3311 = vunpack.c.l.b16 %v3179
    %v3312 = vunpack.c.l.b16 %v3180
    %v3313 = vpack.c.b16 %v3250, %v3249
    %v3314 = vpack.c.b16 %v3252, %v3251
    %v3315 = vpack.c.b16 %v3254, %v3253
    %v3316 = vpack.c.b16 %v3256, %v3255
    %v3317 = vpack.c.b16 %v3258, %v3257
    %v3318 = vpack.c.b16 %v3260, %v3259
    %v3319 = vpack.c.b16 %v3262, %v3261
    %v3320 = vpack.c.b16 %v3264, %v3263
    %v3321 = vpack.c.b16 %v3266, %v3265
    %v3322 = vpack.c.b16 %v3268, %v3267
    %v3323 = vpack.c.b16 %v3270, %v3269
    %v3324 = vpack.c.b16 %v3272, %v3271
    %v3325 = vpack.c.b16 %v3274, %v3273
    %v3326 = vpack.c.b16 %v3276, %v3275
    %v3327 = vpack.c.b16 %v3278, %v3277
    %v3328 = vpack.c.b16 %v3280, %v3279
    %v3329 = vpack.c.b16 %v3282, %v3281
    %v3330 = vpack.c.b16 %v3284, %v3283
    %v3331 = vpack.c.b16 %v3286, %v3285
    %v3332 = vpack.c.b16 %v3288, %v3287
    %v3333 = vpack.c.b16 %v3290, %v3289
    %v3334 = vpack.c.b16 %v3292, %v3291
    %v3335 = vpack.c.b16 %v3294, %v3293
    %v3336 = vpack.c.b16 %v3296, %v3295
    %v3337 = vpack.c.b16 %v3298, %v3297
    %v3338 = vpack.c.b16 %v3300, %v3299
    %v3339 = vpack.c.b16 %v3302, %v3301
    %v3340 = vpack.c.b16 %v3304, %v3303
    %v3341 = vpack.c.b16 %v3306, %v3305
    %v3342 = vpack.c.b16 %v3308, %v3307
    %v3343 = vpack.c.b16 %v3310, %v3309
    %v3344 = vpack.c.b16 %v3312, %v3311
    %3377 = vmatpush.bf16.msra.mxu0 %v3320
    %3378 = vmatpush.bf16.msra.mxu0 %v3319
    %3379 = vmatpush.bf16.msra.mxu0 %v3318
    %3380 = vmatpush.bf16.msra.mxu0 %v3317
    %3381 = vmatpush.bf16.msra.mxu0 %v3316
    %3382 = vmatpush.bf16.msra.mxu0 %v3315
    %3383 = vmatpush.bf16.msra.mxu0 %v3314
    %3384 = vmatpush.bf16.msra.mxu0 %v3313
    %3385 = vmatmul.bf16.gmra.mxu0 %v3113
    %v3386 = vpop.f32.mrf.mxu0
    %v3387 = vadd.f32 %v3183, %v3386
    %v3388 = vpop.f32.mrf.mxu0
    %3389 = vdwg.mxu0
    %3390 = vmatpush.bf16.msra.mxu0 %v3328
    %3391 = vmatpush.bf16.msra.mxu0 %v3327
    %3392 = vmatpush.bf16.msra.mxu0 %v3326
    %3393 = vmatpush.bf16.msra.mxu0 %v3325
    %3394 = vmatpush.bf16.msra.mxu0 %v3324
    %3395 = vmatpush.bf16.msra.mxu0 %v3323
    %3396 = vmatpush.bf16.msra.mxu0 %v3322
    %3397 = vmatpush.bf16.msra.mxu0 %v3321
    %3398 = vmatmul.bf16.gmra.mxu0 %v3114
    %v3399 = vpop.f32.mrf.mxu0
    %v3400 = vadd.f32 %v3387, %v3399
    %v3401 = vpop.f32.mrf.mxu0
    %3402 = vdwg.mxu0
    %3403 = vmatpush.bf16.msra.mxu0 %v3336
    %3404 = vmatpush.bf16.msra.mxu0 %v3335
    %3405 = vmatpush.bf16.msra.mxu0 %v3334
    %3406 = vmatpush.bf16.msra.mxu0 %v3333
    %3407 = vmatpush.bf16.msra.mxu0 %v3332
    %3408 = vmatpush.bf16.msra.mxu0 %v3331
    %3409 = vmatpush.bf16.msra.mxu0 %v3330
    %3410 = vmatpush.bf16.msra.mxu0 %v3329
    %3411 = vmatmul.bf16.gmra.mxu0 %v3115
    %v3412 = vpop.f32.mrf.mxu0
    %v3413 = vadd.f32 %v3400, %v3412
    %v3414 = vpop.f32.mrf.mxu0
    %3415 = vdwg.mxu0
    %3416 = vmatpush.bf16.msra.mxu0 %v3344
    %3417 = vmatpush.bf16.msra.mxu0 %v3343
    %3418 = vmatpush.bf16.msra.mxu0 %v3342
    %3419 = vmatpush.bf16.msra.mxu0 %v3341
    %3420 = vmatpush.bf16.msra.mxu0 %v3340
    %3421 = vmatpush.bf16.msra.mxu0 %v3339
    %3422 = vmatpush.bf16.msra.mxu0 %v3338
    %3423 = vmatpush.bf16.msra.mxu0 %v3337
    %3424 = vmatmul.bf16.gmra.mxu0 %v3116
    %v3425 = vpop.f32.mrf.mxu0
    %v3426 = vadd.f32 %v3413, %v3425
    %v3427 = vpop.f32.mrf.mxu0
    %3428 = vdwg.mxu0
    %3429 = vst [vmem:[#allocation13] sm:$0xff] %v3426
    // Predicated region
    $region54: #{mlp_readout_forward.1} parent=1 // pred_check
      _
    $region55: #{mlp_readout_forward.1} parent=1 // pred_check_branch
      %3431 = sbr.rel (0) target = $region57
    $region56: #{mlp_readout_forward.1} parent=1 // pred_region
      %3433 = vsyncadd [#allocation4], 0
      %s3435 = sshll.u32 [#allocation13], 4
      %s3436 = int_to_ptr.vmem [resolvable:$true] %s3435
      %s3437 = sshll.u32 %s7, 4
      %s3438 = int_to_ptr.hbm [resolvable:$true] %s3437
      %3440 = dma.vmem_to_hbm [thread:$0]  %s3436, 128, %s3438, [#allocation4]
    $region57: #{mlp_readout_forward.1} parent=1 // pred_fallthru
      _
    // Predicated region
    $region58: #{mlp_readout_forward.1} parent=1 // pred_check
      _
    $region59: #{mlp_readout_forward.1} parent=1 // pred_check_branch
      %3442 = sbr.rel (0) target = $region61
    $region60: #{mlp_readout_forward.1} parent=1 // pred_region
      %3444 = dma.done [#allocation4], 128
    $region61: #{mlp_readout_forward.1} parent=1 // pred_fallthru
      _
    %3445 = vsyncpa [#allocation3], 1
    %3446 = vsyncpa [#allocation6], 1
    %3447 = vsyncpa [#allocation9], 1
    %3448 = vsyncpa [#allocation12], 1
    %3449 = vsyncpa [#allocation4], 1

</llo_original>
